<compile_context>
chip_gen: v5e
topology: v5e:2x2
jax: 0.10.0
libtpu: 0.0.40
codegen_flags: <defaults>
</compile_context>

<pallas_src>
import jax
import jax.numpy as jnp
from jax.experimental import pallas as pl
from jax.experimental.pallas import tpu as pltpu


def highway_kernel(x_ref, wcat_ref, bcat_ref, o_ref):
    D = o_ref.shape[-1]

    # One fused matmul: [bb, D] x [D, 2D] -> f32 accumulate, one bias add.
    xw = x_ref[...].astype(wcat_ref.dtype)                     # bf16 MXU operand
    acc = jnp.dot(xw, wcat_ref[...], preferred_element_type=jnp.float32)
    acc = acc + bcat_ref[...]                                   # [1, 2D] broadcast add

    t = jax.nn.sigmoid(acc[:, :D])                              # transform gate (EUP exp)
    h = acc[:, D:]                                              # highway branch

    # Residual read late (narrow live range), f32 blend: x + t*(h - x).
    x = x_ref[...].astype(jnp.float32)
    o_ref[...] = (x + t * (h - x)).astype(o_ref.dtype)


def _pick_block_b(B, requested):
    """Large tiles for DMA efficiency, but >= ~8 grid steps so each v7x core
    gets >= 4 steps of pipelined work (when B allows)."""
    bb = min(requested, B)
    while bb > 256 and pl.cdiv(B, bb) < 8:
        bb //= 2
    if bb < B:
        bb = max(8, (bb // 8) * 8)                              # (8, 128) sublane tiling
    return bb


def _vmem_limit_bytes(bb, D, x_itemsize, out_itemsize, w_itemsize):
    w_bytes = D * (2 * D) * w_itemsize * 2                      # wcat, double-buffered
    b_bytes = (2 * D) * 4 * 2                                   # bcat, double-buffered
    x_bytes = bb * D * x_itemsize * 2                           # x tile, double-buffered
    o_bytes = bb * D * out_itemsize * 2                         # out tile, double-buffered
    tmp_bytes = bb * (2 * D) * 4 + 2 * bb * D * 4               # f32 acc + t/h temporaries
    total = w_bytes + b_bytes + x_bytes + o_bytes + tmp_bytes
    # 2x headroom for compiler temporaries; clamp so the limit is valid on
    # v7x (64 MiB physical VMEM) as well as v5e/v6e (128 MiB).
    return int(min(max(2 * total, 16 << 20), 64 << 20))


def highway_forward(x, wt, bt, wh, bh, *, block_b=512):
    """x: [B, D] (bf16 recommended); wt/wh: [D, D] already laid out [in, out]
    (bf16 recommended); bt/bh: [1, D] f32.  Output dtype == x dtype.

    Note: if B is not a multiple of the chosen tile, the padded rows of the
    last tile compute on garbage but the writeback of those rows is discarded
    by Pallas and the elementwise math cannot contaminate valid rows.
    """
    B, D = x.shape
    bb = _pick_block_b(B, block_b)

    # Fuse the two linears into one [D, 2D] matmul (one-time concat; in a real
    # model pre-concatenate the parameters once outside the step function).
    wcat = jnp.concatenate([wt, wh], axis=1)                    # [D, 2D], bf16
    bcat = jnp.concatenate([bt.astype(jnp.float32),
                            bh.astype(jnp.float32)], axis=1)    # [1, 2D], f32

    cost = pl.CostEstimate(
        flops=4 * B * D * D,                                    # [B,D] x [D,2D]
        transcendentals=B * D,                                  # sigmoid
        bytes_accessed=(x.size * x.dtype.itemsize
                        + B * D * x.dtype.itemsize              # output
                        + wcat.size * wcat.dtype.itemsize
                        + bcat.size * bcat.dtype.itemsize),
    )

    return pl.pallas_call(
        highway_kernel,
        out_shape=jax.ShapeDtypeStruct((B, D), x.dtype),
        grid_spec=pltpu.PrefetchScalarGridSpec(
            num_scalar_prefetch=0,
            grid=(pl.cdiv(B, bb),),
            in_specs=[
                pl.BlockSpec((bb, D), lambda i: (i, 0)),        # x tile
                pl.BlockSpec((D, 2 * D), lambda i: (0, 0)),     # Wt|Wh (resident)
                pl.BlockSpec((1, 2 * D), lambda i: (0, 0)),     # bt|bh (resident)
            ],
            out_specs=pl.BlockSpec((bb, D), lambda i: (i, 0)),
        ),
        compiler_params=pltpu.CompilerParams(
            dimension_semantics=("parallel",),
            vmem_limit_bytes=_vmem_limit_bytes(
                bb, D, x.dtype.itemsize, x.dtype.itemsize, wcat.dtype.itemsize),
        ),
        cost_estimate=cost,
    )(x, wcat, bcat)


def highway_ref(x, wt, bt, wh, bh):
    x32 = x.astype(jnp.float32)
    wt32 = wt.astype(jnp.float32)
    wh32 = wh.astype(jnp.float32)
    t = jax.nn.sigmoid(x32 @ wt32 + bt)
    return t * (x32 @ wh32 + bh) + (1.0 - t) * x32


if __name__ == "__main__":
    # Highway requires in_size == out_size for the residual (1 - t) * x term.
    # D multiple of 128 -> lane-dense stores, full MXU N; B sized so the grid
    # has 8 parallel steps (>= 4 per v7x TensorCore) at the chosen tile.
    B, D = 2048, 256

    key = jax.random.PRNGKey(0)
    kx, kwt, kbt, kwh, kbh = jax.random.split(key, 5)

    # Deterministic param init mimicking nn.Linear's U(-1/sqrt(in), 1/sqrt(in)).
    bound = 1.0 / jnp.sqrt(jnp.float32(D))
    # bf16 activations in/out (kernel is HBM-bound at this size); f32 math inside.
    x = jax.random.normal(kx, (B, D), dtype=jnp.float32).astype(jnp.bfloat16)
    # PyTorch Linear stores weight as [out, in]; pre-transpose to [in, out] and
    # keep in bf16 so the MXU consumes it natively (f32 accumulation in-kernel).
    wt = jax.random.uniform(kwt, (D, D), jnp.float32, -bound, bound).T.astype(jnp.bfloat16)
    bt = jax.random.uniform(kbt, (1, D), jnp.float32, -bound, bound)
    wh = jax.random.uniform(kwh, (D, D), jnp.float32, -bound, bound).T.astype(jnp.bfloat16)
    bh = jax.random.uniform(kbh, (1, D), jnp.float32, -bound, bound)

    out = highway_forward(x, wt, bt, wh, bh)
    out = jax.block_until_ready(out)

    ref = highway_ref(x, wt, bt, wh, bh)
    assert out.shape == (B, D)
    out32 = out.astype(jnp.float32)
    max_err = float(jnp.max(jnp.abs(out32 - ref)))
    assert jnp.allclose(out32, ref, atol=3e-2, rtol=3e-2), (
        f"mismatch vs reference, max abs err={max_err}")

    print("KERNEL_OK")
</pallas_src>

<mosaic_0001>
module attributes {stable_mosaic.version = 11 : i64} {
  func.func @highway_kernel(%arg0: i32, %arg1: memref<256x256xbf16, #tpu.memory_space<vmem>>, %arg2: memref<256x512xbf16, #tpu.memory_space<vmem>>, %arg3: memref<1x512xf32, #tpu.memory_space<vmem>>, %arg4: memref<256x256xbf16, #tpu.memory_space<vmem>>) attributes {dimension_semantics = [#tpu.dimension_semantics<parallel>], iteration_bounds = array<i64: 8>, scalar_prefetch = 0 : i64, scratch_operands = 0 : i64, tpu.core_type = #tpu.core_type<tc>, window_params = [{transform_indices = @transform_0, window_bounds = array<i64: 256, 256>}, {pipeline_mode = #tpu.pipeline_mode<synchronous>, transform_indices = @transform_1, window_bounds = array<i64: 256, 512>}, {pipeline_mode = #tpu.pipeline_mode<synchronous>, transform_indices = @transform_2, window_bounds = array<i64: 1, 512>}, {transform_indices = @transform_3, window_bounds = array<i64: 256, 256>}]} {
    %c0 = arith.constant 0 : index
    %c0_0 = arith.constant 0 : index
    %0 = vector.load %arg1[%c0, %c0_0] : memref<256x256xbf16, #tpu.memory_space<vmem>>, vector<256x256xbf16>
    %c0_1 = arith.constant 0 : index
    %c0_2 = arith.constant 0 : index
    %1 = vector.load %arg2[%c0_1, %c0_2] : memref<256x512xbf16, #tpu.memory_space<vmem>>, vector<256x512xbf16>
    %cst = arith.constant dense<0.000000e+00> : vector<256x512xf32>
    %2 = tpu.matmul %0, %1, %cst {dimension_numbers = #tpu.dot_dimension_numbers<[1], [0], [0], [1], [0, 0, 1, 1], [], []>} : vector<256x256xbf16>, vector<256x512xbf16>, vector<256x512xf32> -> vector<256x512xf32>
    %c0_3 = arith.constant 0 : index
    %c0_4 = arith.constant 0 : index
    %3 = vector.load %arg3[%c0_3, %c0_4] : memref<1x512xf32, #tpu.memory_space<vmem>>, vector<1x512xf32>
    %4 = vector.broadcast %3 : vector<1x512xf32> to vector<256x512xf32>
    %5 = arith.addf %2, %4 : vector<256x512xf32>
    %6 = vector.extract_strided_slice %5 {offsets = [0, 0], sizes = [256, 256], strides = [1, 1]} : vector<256x512xf32> to vector<256x256xf32>
    %7 = arith.negf %6 : vector<256x256xf32>
    %8 = math.exp %7 : vector<256x256xf32>
    %cst_5 = arith.constant 1.000000e+00 : f32
    %9 = vector.broadcast %cst_5 : f32 to vector<256x256xf32>
    %10 = arith.addf %9, %8 : vector<256x256xf32>
    %11 = arith.divf %9, %10 : vector<256x256xf32>
    %12 = vector.extract_strided_slice %5 {offsets = [0, 256], sizes = [256, 256], strides = [1, 1]} : vector<256x512xf32> to vector<256x256xf32>
    %c0_6 = arith.constant 0 : index
    %c0_7 = arith.constant 0 : index
    %13 = vector.load %arg1[%c0_6, %c0_7] : memref<256x256xbf16, #tpu.memory_space<vmem>>, vector<256x256xbf16>
    %14 = arith.extf %13 : vector<256x256xbf16> to vector<256x256xf32>
    %15 = arith.subf %12, %14 : vector<256x256xf32>
    %16 = arith.mulf %11, %15 : vector<256x256xf32>
    %17 = arith.addf %14, %16 : vector<256x256xf32>
    %18 = arith.truncf %17 : vector<256x256xf32> to vector<256x256xbf16>
    %c0_8 = arith.constant 0 : index
    %c0_9 = arith.constant 0 : index
    %19 = vector.load %arg4[%c0_8, %c0_9] : memref<256x256xbf16, #tpu.memory_space<vmem>>, vector<256x256xbf16>
    tpu.vector_store %arg4[%c0_8, %c0_9], %18 {strides = array<i32>} : memref<256x256xbf16, #tpu.memory_space<vmem>>, vector<256x256xbf16>,
    return
  }
  func.func @transform_0(%arg0: i32) -> (i32, i32) {
    %c0_i32 = arith.constant 0 : i32
    %c0_i32_0 = arith.constant 0 : i32
    return %arg0, %c0_i32 : i32, i32
  }
  func.func @transform_1(%arg0: i32) -> (i32, i32) {
    %c0_i32 = arith.constant 0 : i32
    %c0_i32_0 = arith.constant 0 : i32
    %c0_i32_1 = arith.constant 0 : i32
    return %c0_i32, %c0_i32_0 : i32, i32
  }
  func.func @transform_2(%arg0: i32) -> (i32, i32) {
    %c0_i32 = arith.constant 0 : i32
    %c0_i32_0 = arith.constant 0 : i32
    %c0_i32_1 = arith.constant 0 : i32
    return %c0_i32, %c0_i32_0 : i32, i32
  }
  func.func @transform_3(%arg0: i32) -> (i32, i32) {
    %c0_i32 = arith.constant 0 : i32
    %c0_i32_0 = arith.constant 0 : i32
    return %arg0, %c0_i32 : i32, i32
  }
}

</mosaic_0001>

<llo_original>
// kernel: tpu_custom_call.1
$region0: #{tpu_custom_call.1}
  #allocation0 [shape = 'u32[]', space=smem, size = 0x4, offset = 0x4, fixed_abs, tag = 'smem constant byte address 0x4 - core index']
  #allocation1 [shape = 'u32[72,128]{1,0:T(1,128)}', space=vmem, size = 0x9000, scoped, tag = 'internal scratch']
  %s0 = inlined_call_operand.hbm [shape: bf16[2048,256], index: 0, kind: input, shape index: {}]
  %s1 = inlined_call_operand.hbm [shape: bf16[256,512], index: 1, kind: input, shape index: {}]
  %s2 = inlined_call_operand.hbm [shape: f32[1,512], index: 2, kind: input, shape index: {}]
  %s3 = inlined_call_operand.hbm [shape: bf16[2048,256], index: 3, kind: output, shape index: {}]
  %s4 = sld [smem:[#allocation0]]
  $region57: #{tpu_custom_call.1} parent=0
    _
  %s6 = ssub.s32 1, %s4
  %s7 = scalar_select 0, %s6, %s4
  $region1: #{tpu_custom_call.1} parent=0
    #allocation2 [shape = 'u8[262144]{0}', space=vmem, size = 0x40000, scoped, tag = 'input window, operand 0']
    #allocation3 [shape = 's32[2]{0}', space=sflag, size = 0x8, scoped, tag = 'scoped memory for tpu_custom_call.1']
    #allocation4 [shape = 's32[2]{0}', space=sflag, size = 0x8, scoped, tag = 'scoped memory for tpu_custom_call.1']
    #allocation5 [shape = 'u8[262144]{0}', space=vmem, size = 0x40000, scoped, tag = 'input window, operand 1, single buffered']
    #allocation6 [shape = 's32[1]{0}', space=sflag, size = 0x4, scoped, tag = 'scoped memory for tpu_custom_call.1']
    #allocation7 [shape = 'u8[2048]{0}', space=vmem, size = 0x800, scoped, tag = 'input window, operand 2, single buffered']
    #allocation8 [shape = 'u8[262144]{0}', space=vmem, size = 0x40000, scoped, tag = 'output window, operand 0']
    %8 = vsyncpa [#allocation3], 0
    %s9 = scalar_lea.sflag [#allocation3], 1
    %10 = vsyncpa %s9, 0
    %11 = vsyncpa [#allocation6], 0
    %12 = vsyncpa [#allocation4], 0
    %s13 = scalar_lea.sflag [#allocation4], 1
    %14 = vsyncpa %s13, 0
    loop: start=0, step=1, limit=10
    $region2: #{tpu_custom_call.1} parent=1 // loop_pre_header
      _
    $region3: #{tpu_custom_call.1} parent=1 // loop_header
      %s16 = sphi 0, %s20
      %p17 = scmp.ge.s32.totalorder %s16, 10
      %s26 = sphi 0, %s28
      %s29 = sphi 0, %s26
      %s30 = sphi 0, %s29
      %s46 = sphi 0, %s30
      %s50 = sphi 0, %s50
      %s52 = sphi 0, %s50
      %s53 = sphi 0, %s52
      %s67 = sphi 0, %s53
      %s71 = sphi 0, %s71
      %s73 = sphi 0, %s71
      %s74 = sphi 0, %s73
      %s88 = sphi 0, %s74
      %s94 = sphi 0, %s96
      %s97 = sphi 0, %s94
      %s98 = sphi 0, %s97
      %s114 = sphi 0, %s98
    $region4: #{tpu_custom_call.1} parent=1 // loop_header_branch
      %19 = sbr.rel (%p17) target = $region8
    $region5: #{tpu_custom_call.1} parent=1 // loop_body
      %s21 = ssub.s32 %s16, 1
      %s22 = ssub.s32 %s16, 2
      %s23 = sadd.s32 %s16, 1
      %s24 = ssub.s32 %s16, %s23
      %p25 = scmp.eq.s32.totalorder %s24, 0
      %s27 = sadd.s32 %s26, 1
      %s28 = scalar_select %p25, %s26, %s27
      %p31 = pneg %p25
      %p32 = scmp.eq.s32.totalorder %s16, 7
      %p33 = por %p31, %p32
      %p34 = scmp.ne.s32.totalorder %s26, %s29
      %p35 = scmp.eq.s32.totalorder %s16, 0
      %p36 = por %p34, %p35
      %p37 = scmp.ne.s32.totalorder %s26, %s29
      %p38 = scmp.eq.s32.totalorder %s21, 7
      %p39 = por %p37, %p38
      %p40 = scmp.ne.s32.totalorder %s29, %s30
      %p41 = scmp.eq.s32.totalorder %s21, 0
      %p42 = por %p40, %p41
      %p43 = scmp.ne.s32.totalorder %s29, %s30
      %p44 = scmp.eq.s32.totalorder %s22, 7
      %p45 = por %p43, %p44
      %p47 = scmp.ne.s32.totalorder %s30, %s46
      %p48 = scmp.eq.s32.totalorder %s22, 0
      %p49 = por %p47, %p48
      %s51 = sadd.s32 %s50, 1
      %p54 = scmp.eq.s32.totalorder %s16, 7
      %p55 = scmp.ne.s32.totalorder %s50, %s52
      %p56 = scmp.eq.s32.totalorder %s16, 0
      %p57 = por %p55, %p56
      %p58 = scmp.ne.s32.totalorder %s50, %s52
      %p59 = scmp.eq.s32.totalorder %s21, 7
      %p60 = por %p58, %p59
      %p61 = scmp.ne.s32.totalorder %s52, %s53
      %p62 = scmp.eq.s32.totalorder %s21, 0
      %p63 = por %p61, %p62
      %p64 = scmp.ne.s32.totalorder %s52, %s53
      %p65 = scmp.eq.s32.totalorder %s22, 7
      %p66 = por %p64, %p65
      %p68 = scmp.ne.s32.totalorder %s53, %s67
      %p69 = scmp.eq.s32.totalorder %s22, 0
      %p70 = por %p68, %p69
      %s72 = sadd.s32 %s71, 1
      %p75 = scmp.eq.s32.totalorder %s16, 7
      %p76 = scmp.ne.s32.totalorder %s71, %s73
      %p77 = scmp.eq.s32.totalorder %s16, 0
      %p78 = por %p76, %p77
      %p79 = scmp.ne.s32.totalorder %s71, %s73
      %p80 = scmp.eq.s32.totalorder %s21, 7
      %p81 = por %p79, %p80
      %p82 = scmp.ne.s32.totalorder %s73, %s74
      %p83 = scmp.eq.s32.totalorder %s21, 0
      %p84 = por %p82, %p83
      %p85 = scmp.ne.s32.totalorder %s73, %s74
      %p86 = scmp.eq.s32.totalorder %s22, 7
      %p87 = por %p85, %p86
      %p89 = scmp.ne.s32.totalorder %s74, %s88
      %p90 = scmp.eq.s32.totalorder %s22, 0
      %p91 = por %p89, %p90
      %s92 = ssub.s32 %s16, %s23
      %p93 = scmp.eq.s32.totalorder %s92, 0
      %s95 = sadd.s32 %s94, 1
      %s96 = scalar_select %p93, %s94, %s95
      %p99 = pneg %p93
      %p100 = scmp.eq.s32.totalorder %s16, 7
      %p101 = por %p99, %p100
      %p102 = scmp.ne.s32.totalorder %s94, %s97
      %p103 = scmp.eq.s32.totalorder %s16, 0
      %p104 = por %p102, %p103
      %p105 = scmp.ne.s32.totalorder %s94, %s97
      %p106 = scmp.eq.s32.totalorder %s21, 7
      %p107 = por %p105, %p106
      %p108 = scmp.ne.s32.totalorder %s97, %s98
      %p109 = scmp.eq.s32.totalorder %s21, 0
      %p110 = por %p108, %p109
      %p111 = scmp.ne.s32.totalorder %s97, %s98
      %p112 = scmp.eq.s32.totalorder %s22, 7
      %p113 = por %p111, %p112
      %p115 = scmp.ne.s32.totalorder %s98, %s114
      %p116 = scmp.eq.s32.totalorder %s22, 0
      %p117 = por %p115, %p116
      %p118 = scmp.le.s32.totalorder 1, %s16
      %p119 = scmp.lt.s32.totalorder %s16, 9
      %p120 = pnand %p118, %p119
      %p121 = pneg %p120
      // Predicated region
      $region9: #{tpu_custom_call.1} parent=5 // pred_check
        _
      $region10: #{tpu_custom_call.1} parent=5 // pred_check_branch
        %123 = sbr.rel (%p120) target = $region12
      $region11: #{tpu_custom_call.1} parent=5 // pred_region
        %s124 = ssub.s32 %s16, 1
        // Predicated region
        $region13: #{tpu_custom_call.1} parent=11 // pred_check
          %p125 = pneg %p63
        $region14: #{tpu_custom_call.1} parent=11 // pred_check_branch
          %127 = sbr.rel (%p125) target = $region16
        $region15: #{tpu_custom_call.1} parent=11 // pred_region
          %129 = vsyncadd [#allocation6], 0
          %s130 = sshll.u32 %s1, 4
          %s131 = int_to_ptr.hbm [resolvable:$true] %s130
          %s132 = sshll.u32 [#allocation5], 4
          %s133 = int_to_ptr.vmem [resolvable:$true] %s132
          %138 = dma.hbm_to_vmem [thread:$0]  %s131, 8192, %s133, [#allocation6], 256, 256, 16
        $region16: #{tpu_custom_call.1} parent=11 // pred_fallthru
          _
        // Predicated region
        $region17: #{tpu_custom_call.1} parent=11 // pred_check
          %p139 = pneg %p84
        $region18: #{tpu_custom_call.1} parent=11 // pred_check_branch
          %141 = sbr.rel (%p139) target = $region20
        $region19: #{tpu_custom_call.1} parent=11 // pred_region
          %143 = vsyncadd [#allocation6], 0
          %s145 = sshll.u32 %s2, 4
          %s146 = int_to_ptr.hbm [resolvable:$true] %s145
          %s147 = sshll.u32 [#allocation7], 4
          %s148 = int_to_ptr.vmem [resolvable:$true] %s147
          %150 = dma.hbm_to_vmem [thread:$0]  %s146, 64, %s148, [#allocation6]
        $region20: #{tpu_custom_call.1} parent=11 // pred_fallthru
          _
      $region12: #{tpu_custom_call.1} parent=5 // pred_fallthru
        _
      %p151 = scmp.lt.s32.totalorder %s16, 8
      // Predicated region
      $region21: #{tpu_custom_call.1} parent=5 // pred_check
        %p152 = pneg %p151
      $region22: #{tpu_custom_call.1} parent=5 // pred_check_branch
        %154 = sbr.rel (%p152) target = $region24
      $region23: #{tpu_custom_call.1} parent=5 // pred_region
        // Predicated region
        $region25: #{tpu_custom_call.1} parent=23 // pred_check
          %p155 = pneg %p36
        $region26: #{tpu_custom_call.1} parent=23 // pred_check_branch
          %157 = sbr.rel (%p155) target = $region28
        $region27: #{tpu_custom_call.1} parent=23 // pred_region
          %s158 = sand.u32 %s26, 1
          %s159 = scalar_lea.sflag [#allocation3], %s158
          %s160 = sand.u32 %s26, 1
          %s161 = smul.addr %s160, 256
          %s162 = scalar_lea.vmem [#allocation2], %s161
          %s163 = smul.u32 32, %s16
          %165 = vsyncadd %s159, 0
          %s166 = smul.addr %s163, 2
          %s167 = smul.addr %s166, 4
          %s168 = scalar_lea.hbm %s0, %s167
          %s169 = sshll.u32 %s168, 4
          %s170 = int_to_ptr.hbm [resolvable:$true] %s169
          %s171 = sshll.u32 %s162, 4
          %s172 = int_to_ptr.vmem [resolvable:$true] %s171
          %177 = dma.hbm_to_vmem [thread:$0]  %s170, 4096, %s172, %s159, 128, 128, 8
        $region28: #{tpu_custom_call.1} parent=23 // pred_fallthru
          _
      $region24: #{tpu_custom_call.1} parent=5 // pred_fallthru
        _
      %p178 = scmp.le.s32.totalorder 1, %s16
      %p179 = scmp.lt.s32.totalorder %s16, 9
      %p180 = pnand %p178, %p179
      %p181 = pneg %p180
      // Predicated region
      $region29: #{tpu_custom_call.1} parent=5 // pred_check
        _
      $region30: #{tpu_custom_call.1} parent=5 // pred_check_branch
        %183 = sbr.rel (%p180) target = $region32
      $region31: #{tpu_custom_call.1} parent=5 // pred_region
        %s184 = ssub.s32 %s16, 1
        %s185 = sand.u32 %s29, 1
        %s186 = scalar_lea.sflag [#allocation3], %s185
        %s187 = sand.u32 %s29, 1
        %s188 = smul.addr %s187, 256
        %s189 = scalar_lea.vmem [#allocation2], %s188
        // Predicated region
        $region33: #{tpu_custom_call.1} parent=31 // pred_check
          %p190 = pneg %p42
        $region34: #{tpu_custom_call.1} parent=31 // pred_check_branch
          %192 = sbr.rel (%p190) target = $region36
        $region35: #{tpu_custom_call.1} parent=31 // pred_region
          %194 = dma.done %s186, 4096
        $region36: #{tpu_custom_call.1} parent=31 // pred_fallthru
          _
        // Predicated region
        $region37: #{tpu_custom_call.1} parent=31 // pred_check
          %p195 = pneg %p63
        $region38: #{tpu_custom_call.1} parent=31 // pred_check_branch
          %197 = sbr.rel (%p195) target = $region40
        $region39: #{tpu_custom_call.1} parent=31 // pred_region
          %199 = dma.done [#allocation6], 8192
        $region40: #{tpu_custom_call.1} parent=31 // pred_fallthru
          _
        // Predicated region
        $region41: #{tpu_custom_call.1} parent=31 // pred_check
          %p200 = pneg %p84
        $region42: #{tpu_custom_call.1} parent=31 // pred_check_branch
          %202 = sbr.rel (%p200) target = $region44
        $region43: #{tpu_custom_call.1} parent=31 // pred_region
          %204 = dma.done [#allocation6], 64
        $region44: #{tpu_custom_call.1} parent=31 // pred_fallthru
          _
        %s205 = sand.u32 %s29, 1
        %s206 = scalar_lea.sflag [#allocation3], %s205
        %s207 = sand.u32 %s29, 1
        %s208 = smul.addr %s207, 256
        %s209 = scalar_lea.vmem [#allocation2], %s208
        %p210 = pneg %p42
        %p211 = pneg %p39
        %p212 = pneg %p63
        %p213 = pneg %p60
        %p214 = pneg %p84
        %p215 = pneg %p81
        %p216 = pneg %p110
        %p217 = pneg %p107
        %s218 = sand.u32 %s97, 1
        %s219 = scalar_lea.sflag [#allocation4], %s218
        %s220 = sand.u32 %s97, 1
        %s221 = smul.addr %s220, 256
        %s222 = scalar_lea.vmem [#allocation8], %s221
        %s223 = smul.u32 32, %s21
        %s224 = smul.u32 32, %s21
        %v225 = vld [vmem:[%s189] sm:$0xff]
        %v226 = vld [vmem:[%s189 + $0x8] sm:$0xff]
        %v227 = vld [vmem:[%s189 + $0x10] sm:$0xff]
        %v228 = vld [vmem:[%s189 + $0x18] sm:$0xff]
        %v229 = vld [vmem:[%s189 + $0x20] sm:$0xff]
        %v230 = vld [vmem:[%s189 + $0x28] sm:$0xff]
        %v231 = vld [vmem:[%s189 + $0x30] sm:$0xff]
        %v232 = vld [vmem:[%s189 + $0x38] sm:$0xff]
        %v233 = vld [vmem:[%s189 + $0x40] sm:$0xff]
        %v234 = vld [vmem:[%s189 + $0x48] sm:$0xff]
        %v235 = vld [vmem:[%s189 + $0x50] sm:$0xff]
        %v236 = vld [vmem:[%s189 + $0x58] sm:$0xff]
        %v237 = vld [vmem:[%s189 + $0x60] sm:$0xff]
        %v238 = vld [vmem:[%s189 + $0x68] sm:$0xff]
        %v239 = vld [vmem:[%s189 + $0x70] sm:$0xff]
        %v240 = vld [vmem:[%s189 + $0x78] sm:$0xff]
        %v241 = vld [vmem:[%s189 + $0x80] sm:$0xff]
        %v242 = vld [vmem:[%s189 + $0x88] sm:$0xff]
        %v243 = vld [vmem:[%s189 + $0x90] sm:$0xff]
        %v244 = vld [vmem:[%s189 + $0x98] sm:$0xff]
        %v245 = vld [vmem:[%s189 + $0xa0] sm:$0xff]
        %v246 = vld [vmem:[%s189 + $0xa8] sm:$0xff]
        %v247 = vld [vmem:[%s189 + $0xb0] sm:$0xff]
        %v248 = vld [vmem:[%s189 + $0xb8] sm:$0xff]
        %v249 = vld [vmem:[%s189 + $0xc0] sm:$0xff]
        %v250 = vld [vmem:[%s189 + $0xc8] sm:$0xff]
        %v251 = vld [vmem:[%s189 + $0xd0] sm:$0xff]
        %v252 = vld [vmem:[%s189 + $0xd8] sm:$0xff]
        %v253 = vld [vmem:[%s189 + $0xe0] sm:$0xff]
        %v254 = vld [vmem:[%s189 + $0xe8] sm:$0xff]
        %v255 = vld [vmem:[%s189 + $0xf0] sm:$0xff]
        %v256 = vld [vmem:[%s189 + $0xf8] sm:$0xff]
        %v257 = vld [vmem:[#allocation5] sm:$0xff]
        %v258 = vld [vmem:[#allocation5 + $0x8] sm:$0xff]
        %v259 = vld [vmem:[#allocation5 + $0x10] sm:$0xff]
        %v260 = vld [vmem:[#allocation5 + $0x18] sm:$0xff]
        %v261 = vld [vmem:[#allocation5 + $0x20] sm:$0xff]
        %v262 = vld [vmem:[#allocation5 + $0x28] sm:$0xff]
        %v263 = vld [vmem:[#allocation5 + $0x30] sm:$0xff]
        %v264 = vld [vmem:[#allocation5 + $0x38] sm:$0xff]
        %v265 = vld [vmem:[#allocation5 + $0x40] sm:$0xff]
        %v266 = vld [vmem:[#allocation5 + $0x48] sm:$0xff]
        %v267 = vld [vmem:[#allocation5 + $0x50] sm:$0xff]
        %v268 = vld [vmem:[#allocation5 + $0x58] sm:$0xff]
        %v269 = vld [vmem:[#allocation5 + $0x60] sm:$0xff]
        %v270 = vld [vmem:[#allocation5 + $0x68] sm:$0xff]
        %v271 = vld [vmem:[#allocation5 + $0x70] sm:$0xff]
        %v272 = vld [vmem:[#allocation5 + $0x78] sm:$0xff]
        %v273 = vld [vmem:[#allocation5 + $0x80] sm:$0xff]
        %v274 = vld [vmem:[#allocation5 + $0x88] sm:$0xff]
        %v275 = vld [vmem:[#allocation5 + $0x90] sm:$0xff]
        %v276 = vld [vmem:[#allocation5 + $0x98] sm:$0xff]
        %v277 = vld [vmem:[#allocation5 + $0xa0] sm:$0xff]
        %v278 = vld [vmem:[#allocation5 + $0xa8] sm:$0xff]
        %v279 = vld [vmem:[#allocation5 + $0xb0] sm:$0xff]
        %v280 = vld [vmem:[#allocation5 + $0xb8] sm:$0xff]
        %v281 = vld [vmem:[#allocation5 + $0xc0] sm:$0xff]
        %v282 = vld [vmem:[#allocation5 + $0xc8] sm:$0xff]
        %v283 = vld [vmem:[#allocation5 + $0xd0] sm:$0xff]
        %v284 = vld [vmem:[#allocation5 + $0xd8] sm:$0xff]
        %v285 = vld [vmem:[#allocation5 + $0xe0] sm:$0xff]
        %v286 = vld [vmem:[#allocation5 + $0xe8] sm:$0xff]
        %v287 = vld [vmem:[#allocation5 + $0xf0] sm:$0xff]
        %v288 = vld [vmem:[#allocation5 + $0xf8] sm:$0xff]
        %v289 = vld [vmem:[#allocation5 + $0x100] sm:$0xff]
        %v290 = vld [vmem:[#allocation5 + $0x108] sm:$0xff]
        %v291 = vld [vmem:[#allocation5 + $0x110] sm:$0xff]
        %v292 = vld [vmem:[#allocation5 + $0x118] sm:$0xff]
        %v293 = vld [vmem:[#allocation5 + $0x120] sm:$0xff]
        %v294 = vld [vmem:[#allocation5 + $0x128] sm:$0xff]
        %v295 = vld [vmem:[#allocation5 + $0x130] sm:$0xff]
        %v296 = vld [vmem:[#allocation5 + $0x138] sm:$0xff]
        %v297 = vld [vmem:[#allocation5 + $0x140] sm:$0xff]
        %v298 = vld [vmem:[#allocation5 + $0x148] sm:$0xff]
        %v299 = vld [vmem:[#allocation5 + $0x150] sm:$0xff]
        %v300 = vld [vmem:[#allocation5 + $0x158] sm:$0xff]
        %v301 = vld [vmem:[#allocation5 + $0x160] sm:$0xff]
        %v302 = vld [vmem:[#allocation5 + $0x168] sm:$0xff]
        %v303 = vld [vmem:[#allocation5 + $0x170] sm:$0xff]
        %v304 = vld [vmem:[#allocation5 + $0x178] sm:$0xff]
        %v305 = vld [vmem:[#allocation5 + $0x180] sm:$0xff]
        %v306 = vld [vmem:[#allocation5 + $0x188] sm:$0xff]
        %v307 = vld [vmem:[#allocation5 + $0x190] sm:$0xff]
        %v308 = vld [vmem:[#allocation5 + $0x198] sm:$0xff]
        %v309 = vld [vmem:[#allocation5 + $0x1a0] sm:$0xff]
        %v310 = vld [vmem:[#allocation5 + $0x1a8] sm:$0xff]
        %v311 = vld [vmem:[#allocation5 + $0x1b0] sm:$0xff]
        %v312 = vld [vmem:[#allocation5 + $0x1b8] sm:$0xff]
        %v313 = vld [vmem:[#allocation5 + $0x1c0] sm:$0xff]
        %v314 = vld [vmem:[#allocation5 + $0x1c8] sm:$0xff]
        %v315 = vld [vmem:[#allocation5 + $0x1d0] sm:$0xff]
        %v316 = vld [vmem:[#allocation5 + $0x1d8] sm:$0xff]
        %v317 = vld [vmem:[#allocation5 + $0x1e0] sm:$0xff]
        %v318 = vld [vmem:[#allocation5 + $0x1e8] sm:$0xff]
        %v319 = vld [vmem:[#allocation5 + $0x1f0] sm:$0xff]
        %v320 = vld [vmem:[#allocation5 + $0x1f8] sm:$0xff]
        %v321 = vld [vmem:[#allocation7] sm:$0xf]
        %v323 = vperm.slane %v321, 0
        %v324 = vperm.slane %v321, 1
        %v325 = vperm.slane %v321, 2
        %v326 = vperm.slane %v321, 3
        %v363 = vunpack.c.l.b16 %v225
        %v364 = vunpack.c.h.b16 %v225
        %v365 = vunpack.c.l.b16 %v226
        %v366 = vunpack.c.h.b16 %v226
        %v367 = vunpack.c.l.b16 %v227
        %v368 = vunpack.c.h.b16 %v227
        %v369 = vunpack.c.l.b16 %v228
        %v370 = vunpack.c.h.b16 %v228
        %v371 = vunpack.c.l.b16 %v229
        %v372 = vunpack.c.h.b16 %v229
        %v373 = vunpack.c.l.b16 %v230
        %v374 = vunpack.c.h.b16 %v230
        %v375 = vunpack.c.l.b16 %v231
        %v376 = vunpack.c.h.b16 %v231
        %v377 = vunpack.c.l.b16 %v232
        %v378 = vunpack.c.h.b16 %v232
        %v379 = vunpack.c.l.b16 %v233
        %v380 = vunpack.c.h.b16 %v233
        %v381 = vunpack.c.l.b16 %v234
        %v382 = vunpack.c.h.b16 %v234
        %v383 = vunpack.c.l.b16 %v235
        %v384 = vunpack.c.h.b16 %v235
        %v385 = vunpack.c.l.b16 %v236
        %v386 = vunpack.c.h.b16 %v236
        %v387 = vunpack.c.l.b16 %v237
        %v388 = vunpack.c.h.b16 %v237
        %v389 = vunpack.c.l.b16 %v238
        %v390 = vunpack.c.h.b16 %v238
        %v391 = vunpack.c.l.b16 %v239
        %v392 = vunpack.c.h.b16 %v239
        %v393 = vunpack.c.l.b16 %v240
        %v394 = vunpack.c.h.b16 %v240
        %v395 = vunpack.c.l.b16 %v241
        %v396 = vunpack.c.h.b16 %v241
        %v397 = vunpack.c.l.b16 %v242
        %v398 = vunpack.c.h.b16 %v242
        %v399 = vunpack.c.l.b16 %v243
        %v400 = vunpack.c.h.b16 %v243
        %v401 = vunpack.c.l.b16 %v244
        %v402 = vunpack.c.h.b16 %v244
        %v403 = vunpack.c.l.b16 %v245
        %v404 = vunpack.c.h.b16 %v245
        %v405 = vunpack.c.l.b16 %v246
        %v406 = vunpack.c.h.b16 %v246
        %v407 = vunpack.c.l.b16 %v247
        %v408 = vunpack.c.h.b16 %v247
        %v409 = vunpack.c.l.b16 %v248
        %v410 = vunpack.c.h.b16 %v248
        %v411 = vunpack.c.l.b16 %v249
        %v412 = vunpack.c.h.b16 %v249
        %v413 = vunpack.c.l.b16 %v250
        %v414 = vunpack.c.h.b16 %v250
        %v415 = vunpack.c.l.b16 %v251
        %v416 = vunpack.c.h.b16 %v251
        %v417 = vunpack.c.l.b16 %v252
        %v418 = vunpack.c.h.b16 %v252
        %v419 = vunpack.c.l.b16 %v253
        %v420 = vunpack.c.h.b16 %v253
        %v421 = vunpack.c.l.b16 %v254
        %v422 = vunpack.c.h.b16 %v254
        %v423 = vunpack.c.l.b16 %v255
        %v424 = vunpack.c.h.b16 %v255
        %v425 = vunpack.c.l.b16 %v256
        %v426 = vunpack.c.h.b16 %v256
        %v427 = vpack.c.b16 %v365, %v363
        %v428 = vpack.c.b16 %v366, %v364
        %v429 = vpack.c.b16 %v369, %v367
        %v430 = vpack.c.b16 %v370, %v368
        %v431 = vpack.c.b16 %v373, %v371
        %v432 = vpack.c.b16 %v374, %v372
        %v433 = vpack.c.b16 %v377, %v375
        %v434 = vpack.c.b16 %v378, %v376
        %v435 = vpack.c.b16 %v381, %v379
        %v436 = vpack.c.b16 %v382, %v380
        %v437 = vpack.c.b16 %v385, %v383
        %v438 = vpack.c.b16 %v386, %v384
        %v439 = vpack.c.b16 %v389, %v387
        %v440 = vpack.c.b16 %v390, %v388
        %v441 = vpack.c.b16 %v393, %v391
        %v442 = vpack.c.b16 %v394, %v392
        %v443 = vpack.c.b16 %v397, %v395
        %v444 = vpack.c.b16 %v398, %v396
        %v445 = vpack.c.b16 %v401, %v399
        %v446 = vpack.c.b16 %v402, %v400
        %v447 = vpack.c.b16 %v405, %v403
        %v448 = vpack.c.b16 %v406, %v404
        %v449 = vpack.c.b16 %v409, %v407
        %v450 = vpack.c.b16 %v410, %v408
        %v451 = vpack.c.b16 %v413, %v411
        %v452 = vpack.c.b16 %v414, %v412
        %v453 = vpack.c.b16 %v417, %v415
        %v454 = vpack.c.b16 %v418, %v416
        %v455 = vpack.c.b16 %v421, %v419
        %v456 = vpack.c.b16 %v422, %v420
        %v457 = vpack.c.b16 %v425, %v423
        %v458 = vpack.c.b16 %v426, %v424
        %v555 = vunpack.c.l.b16 %v257
        %v556 = vunpack.c.h.b16 %v257
        %v557 = vunpack.c.l.b16 %v258
        %v558 = vunpack.c.h.b16 %v258
        %v559 = vunpack.c.l.b16 %v259
        %v560 = vunpack.c.h.b16 %v259
        %v561 = vunpack.c.l.b16 %v260
        %v562 = vunpack.c.h.b16 %v260
        %v563 = vunpack.c.l.b16 %v261
        %v564 = vunpack.c.h.b16 %v261
        %v565 = vunpack.c.l.b16 %v262
        %v566 = vunpack.c.h.b16 %v262
        %v567 = vunpack.c.l.b16 %v263
        %v568 = vunpack.c.h.b16 %v263
        %v569 = vunpack.c.l.b16 %v264
        %v570 = vunpack.c.h.b16 %v264
        %v571 = vunpack.c.l.b16 %v265
        %v572 = vunpack.c.h.b16 %v265
        %v573 = vunpack.c.l.b16 %v266
        %v574 = vunpack.c.h.b16 %v266
        %v575 = vunpack.c.l.b16 %v267
        %v576 = vunpack.c.h.b16 %v267
        %v577 = vunpack.c.l.b16 %v268
        %v578 = vunpack.c.h.b16 %v268
        %v579 = vunpack.c.l.b16 %v269
        %v580 = vunpack.c.h.b16 %v269
        %v581 = vunpack.c.l.b16 %v270
        %v582 = vunpack.c.h.b16 %v270
        %v583 = vunpack.c.l.b16 %v271
        %v584 = vunpack.c.h.b16 %v271
        %v585 = vunpack.c.l.b16 %v272
        %v586 = vunpack.c.h.b16 %v272
        %v587 = vunpack.c.l.b16 %v273
        %v588 = vunpack.c.h.b16 %v273
        %v589 = vunpack.c.l.b16 %v274
        %v590 = vunpack.c.h.b16 %v274
        %v591 = vunpack.c.l.b16 %v275
        %v592 = vunpack.c.h.b16 %v275
        %v593 = vunpack.c.l.b16 %v276
        %v594 = vunpack.c.h.b16 %v276
        %v595 = vunpack.c.l.b16 %v277
        %v596 = vunpack.c.h.b16 %v277
        %v597 = vunpack.c.l.b16 %v278
        %v598 = vunpack.c.h.b16 %v278
        %v599 = vunpack.c.l.b16 %v279
        %v600 = vunpack.c.h.b16 %v279
        %v601 = vunpack.c.l.b16 %v280
        %v602 = vunpack.c.h.b16 %v280
        %v603 = vunpack.c.l.b16 %v281
        %v604 = vunpack.c.h.b16 %v281
        %v605 = vunpack.c.l.b16 %v282
        %v606 = vunpack.c.h.b16 %v282
        %v607 = vunpack.c.l.b16 %v283
        %v608 = vunpack.c.h.b16 %v283
        %v609 = vunpack.c.l.b16 %v284
        %v610 = vunpack.c.h.b16 %v284
        %v611 = vunpack.c.l.b16 %v285
        %v612 = vunpack.c.h.b16 %v285
        %v613 = vunpack.c.l.b16 %v286
        %v614 = vunpack.c.h.b16 %v286
        %v615 = vunpack.c.l.b16 %v287
        %v616 = vunpack.c.h.b16 %v287
        %v617 = vunpack.c.l.b16 %v288
        %v618 = vunpack.c.h.b16 %v288
        %v619 = vunpack.c.l.b16 %v289
        %v620 = vunpack.c.h.b16 %v289
        %v621 = vunpack.c.l.b16 %v290
        %v622 = vunpack.c.h.b16 %v290
        %v623 = vunpack.c.l.b16 %v291
        %v624 = vunpack.c.h.b16 %v291
        %v625 = vunpack.c.l.b16 %v292
        %v626 = vunpack.c.h.b16 %v292
        %v627 = vunpack.c.l.b16 %v293
        %v628 = vunpack.c.h.b16 %v293
        %v629 = vunpack.c.l.b16 %v294
        %v630 = vunpack.c.h.b16 %v294
        %v631 = vunpack.c.l.b16 %v295
        %v632 = vunpack.c.h.b16 %v295
        %v633 = vunpack.c.l.b16 %v296
        %v634 = vunpack.c.h.b16 %v296
        %v635 = vunpack.c.l.b16 %v297
        %v636 = vunpack.c.h.b16 %v297
        %v637 = vunpack.c.l.b16 %v298
        %v638 = vunpack.c.h.b16 %v298
        %v639 = vunpack.c.l.b16 %v299
        %v640 = vunpack.c.h.b16 %v299
        %v641 = vunpack.c.l.b16 %v300
        %v642 = vunpack.c.h.b16 %v300
        %v643 = vunpack.c.l.b16 %v301
        %v644 = vunpack.c.h.b16 %v301
        %v645 = vunpack.c.l.b16 %v302
        %v646 = vunpack.c.h.b16 %v302
        %v647 = vunpack.c.l.b16 %v303
        %v648 = vunpack.c.h.b16 %v303
        %v649 = vunpack.c.l.b16 %v304
        %v650 = vunpack.c.h.b16 %v304
        %v651 = vunpack.c.l.b16 %v305
        %v652 = vunpack.c.h.b16 %v305
        %v653 = vunpack.c.l.b16 %v306
        %v654 = vunpack.c.h.b16 %v306
        %v655 = vunpack.c.l.b16 %v307
        %v656 = vunpack.c.h.b16 %v307
        %v657 = vunpack.c.l.b16 %v308
        %v658 = vunpack.c.h.b16 %v308
        %v659 = vunpack.c.l.b16 %v309
        %v660 = vunpack.c.h.b16 %v309
        %v661 = vunpack.c.l.b16 %v310
        %v662 = vunpack.c.h.b16 %v310
        %v663 = vunpack.c.l.b16 %v311
        %v664 = vunpack.c.h.b16 %v311
        %v665 = vunpack.c.l.b16 %v312
        %v666 = vunpack.c.h.b16 %v312
        %v667 = vunpack.c.l.b16 %v313
        %v668 = vunpack.c.h.b16 %v313
        %v669 = vunpack.c.l.b16 %v314
        %v670 = vunpack.c.h.b16 %v314
        %v671 = vunpack.c.l.b16 %v315
        %v672 = vunpack.c.h.b16 %v315
        %v673 = vunpack.c.l.b16 %v316
        %v674 = vunpack.c.h.b16 %v316
        %v675 = vunpack.c.l.b16 %v317
        %v676 = vunpack.c.h.b16 %v317
        %v677 = vunpack.c.l.b16 %v318
        %v678 = vunpack.c.h.b16 %v318
        %v679 = vunpack.c.l.b16 %v319
        %v680 = vunpack.c.h.b16 %v319
        %v681 = vunpack.c.l.b16 %v320
        %v682 = vunpack.c.h.b16 %v320
        %v683 = vpack.c.b16 %v559, %v555
        %v684 = vpack.c.b16 %v560, %v556
        %v685 = vpack.c.b16 %v561, %v557
        %v686 = vpack.c.b16 %v562, %v558
        %v687 = vpack.c.b16 %v567, %v563
        %v688 = vpack.c.b16 %v568, %v564
        %v689 = vpack.c.b16 %v569, %v565
        %v690 = vpack.c.b16 %v570, %v566
        %v691 = vpack.c.b16 %v575, %v571
        %v692 = vpack.c.b16 %v576, %v572
        %v693 = vpack.c.b16 %v577, %v573
        %v694 = vpack.c.b16 %v578, %v574
        %v695 = vpack.c.b16 %v583, %v579
        %v696 = vpack.c.b16 %v584, %v580
        %v697 = vpack.c.b16 %v585, %v581
        %v698 = vpack.c.b16 %v586, %v582
        %v699 = vpack.c.b16 %v591, %v587
        %v700 = vpack.c.b16 %v592, %v588
        %v701 = vpack.c.b16 %v593, %v589
        %v702 = vpack.c.b16 %v594, %v590
        %v703 = vpack.c.b16 %v599, %v595
        %v704 = vpack.c.b16 %v600, %v596
        %v705 = vpack.c.b16 %v601, %v597
        %v706 = vpack.c.b16 %v602, %v598
        %v707 = vpack.c.b16 %v607, %v603
        %v708 = vpack.c.b16 %v608, %v604
        %v709 = vpack.c.b16 %v609, %v605
        %v710 = vpack.c.b16 %v610, %v606
        %v711 = vpack.c.b16 %v615, %v611
        %v712 = vpack.c.b16 %v616, %v612
        %v713 = vpack.c.b16 %v617, %v613
        %v714 = vpack.c.b16 %v618, %v614
        %v715 = vpack.c.b16 %v623, %v619
        %v716 = vpack.c.b16 %v624, %v620
        %v717 = vpack.c.b16 %v625, %v621
        %v718 = vpack.c.b16 %v626, %v622
        %v719 = vpack.c.b16 %v631, %v627
        %v720 = vpack.c.b16 %v632, %v628
        %v721 = vpack.c.b16 %v633, %v629
        %v722 = vpack.c.b16 %v634, %v630
        %v723 = vpack.c.b16 %v639, %v635
        %v724 = vpack.c.b16 %v640, %v636
        %v725 = vpack.c.b16 %v641, %v637
        %v726 = vpack.c.b16 %v642, %v638
        %v727 = vpack.c.b16 %v647, %v643
        %v728 = vpack.c.b16 %v648, %v644
        %v729 = vpack.c.b16 %v649, %v645
        %v730 = vpack.c.b16 %v650, %v646
        %v731 = vpack.c.b16 %v655, %v651
        %v732 = vpack.c.b16 %v656, %v652
        %v733 = vpack.c.b16 %v657, %v653
        %v734 = vpack.c.b16 %v658, %v654
        %v735 = vpack.c.b16 %v663, %v659
        %v736 = vpack.c.b16 %v664, %v660
        %v737 = vpack.c.b16 %v665, %v661
        %v738 = vpack.c.b16 %v666, %v662
        %v739 = vpack.c.b16 %v671, %v667
        %v740 = vpack.c.b16 %v672, %v668
        %v741 = vpack.c.b16 %v673, %v669
        %v742 = vpack.c.b16 %v674, %v670
        %v743 = vpack.c.b16 %v679, %v675
        %v744 = vpack.c.b16 %v680, %v676
        %v745 = vpack.c.b16 %v681, %v677
        %v746 = vpack.c.b16 %v682, %v678
        %811 = vmatpush.bf16.msra.mxu0 %v711
        %812 = vmatpush.bf16.msra.mxu0 %v707
        %813 = vmatpush.bf16.msra.mxu0 %v703
        %814 = vmatpush.bf16.msra.mxu0 %v699
        %815 = vmatpush.bf16.msra.mxu0 %v695
        %816 = vmatpush.bf16.msra.mxu0 %v691
        %817 = vmatpush.bf16.msra.mxu0 %v687
        %818 = vmatpush.bf16.msra.mxu0 %v683
        %819 = vmatmul.bf16.gmra.mxu0 %v427
        %v820 = vpop.f32.mrf.mxu0
        %v821 = vadd.f32 %v323, %v820
        %v822 = vpop.f32.mrf.mxu0
        %v823 = vadd.f32 %v323, %v822
        %824 = vmatmul.bf16.gmra.mxu0 %v429
        %v825 = vpop.f32.mrf.mxu0
        %v826 = vadd.f32 %v323, %v825
        %v827 = vpop.f32.mrf.mxu0
        %v828 = vadd.f32 %v323, %v827
        %829 = vmatmul.bf16.gmra.mxu0 %v431
        %v830 = vpop.f32.mrf.mxu0
        %v831 = vadd.f32 %v323, %v830
        %v832 = vpop.f32.mrf.mxu0
        %v833 = vadd.f32 %v323, %v832
        %834 = vmatmul.bf16.gmra.mxu0 %v433
        %v835 = vpop.f32.mrf.mxu0
        %v836 = vadd.f32 %v323, %v835
        %v837 = vpop.f32.mrf.mxu0
        %v838 = vadd.f32 %v323, %v837
        %839 = vmatmul.bf16.gmra.mxu0 %v435
        %v840 = vpop.f32.mrf.mxu0
        %v841 = vadd.f32 %v323, %v840
        %v842 = vpop.f32.mrf.mxu0
        %v843 = vadd.f32 %v323, %v842
        %844 = vmatmul.bf16.gmra.mxu0 %v437
        %v845 = vpop.f32.mrf.mxu0
        %v846 = vadd.f32 %v323, %v845
        %v847 = vpop.f32.mrf.mxu0
        %v848 = vadd.f32 %v323, %v847
        %849 = vmatmul.bf16.gmra.mxu0 %v439
        %v850 = vpop.f32.mrf.mxu0
        %v851 = vadd.f32 %v323, %v850
        %v852 = vpop.f32.mrf.mxu0
        %v853 = vadd.f32 %v323, %v852
        %854 = vmatmul.bf16.gmra.mxu0 %v441
        %v855 = vpop.f32.mrf.mxu0
        %v856 = vadd.f32 %v323, %v855
        %v857 = vpop.f32.mrf.mxu0
        %v858 = vadd.f32 %v323, %v857
        %859 = vmatmul.bf16.gmra.mxu0 %v443
        %v860 = vpop.f32.mrf.mxu0
        %v861 = vadd.f32 %v323, %v860
        %v862 = vpop.f32.mrf.mxu0
        %v863 = vadd.f32 %v323, %v862
        %864 = vmatmul.bf16.gmra.mxu0 %v445
        %v865 = vpop.f32.mrf.mxu0
        %v866 = vadd.f32 %v323, %v865
        %v867 = vpop.f32.mrf.mxu0
        %v868 = vadd.f32 %v323, %v867
        %869 = vmatmul.bf16.gmra.mxu0 %v447
        %v870 = vpop.f32.mrf.mxu0
        %v871 = vadd.f32 %v323, %v870
        %v872 = vpop.f32.mrf.mxu0
        %v873 = vadd.f32 %v323, %v872
        %874 = vmatmul.bf16.gmra.mxu0 %v449
        %v875 = vpop.f32.mrf.mxu0
        %v876 = vadd.f32 %v323, %v875
        %v877 = vpop.f32.mrf.mxu0
        %v878 = vadd.f32 %v323, %v877
        %879 = vmatmul.bf16.gmra.mxu0 %v451
        %v880 = vpop.f32.mrf.mxu0
        %v881 = vadd.f32 %v323, %v880
        %v882 = vpop.f32.mrf.mxu0
        %v883 = vadd.f32 %v323, %v882
        %884 = vmatmul.bf16.gmra.mxu0 %v453
        %v885 = vpop.f32.mrf.mxu0
        %v886 = vadd.f32 %v323, %v885
        %v887 = vpop.f32.mrf.mxu0
        %v888 = vadd.f32 %v323, %v887
        %889 = vmatmul.bf16.gmra.mxu0 %v455
        %v890 = vpop.f32.mrf.mxu0
        %v891 = vadd.f32 %v323, %v890
        %v892 = vpop.f32.mrf.mxu0
        %v893 = vadd.f32 %v323, %v892
        %894 = vmatmul.bf16.gmra.mxu0 %v457
        %v895 = vpop.f32.mrf.mxu0
        %v896 = vadd.f32 %v323, %v895
        %v897 = vpop.f32.mrf.mxu0
        %v898 = vadd.f32 %v323, %v897
        %899 = vdwg.mxu0
        %900 = vmatpush.bf16.msra.mxu0 %v743
        %901 = vmatpush.bf16.msra.mxu0 %v739
        %902 = vmatpush.bf16.msra.mxu0 %v735
        %903 = vmatpush.bf16.msra.mxu0 %v731
        %904 = vmatpush.bf16.msra.mxu0 %v727
        %905 = vmatpush.bf16.msra.mxu0 %v723
        %906 = vmatpush.bf16.msra.mxu0 %v719
        %907 = vmatpush.bf16.msra.mxu0 %v715
        %908 = vmatmul.bf16.gmra.mxu0 %v428
        %v909 = vpop.f32.mrf.mxu0
        %v910 = vadd.f32 %v821, %v909
        %v911 = vpop.f32.mrf.mxu0
        %v912 = vadd.f32 %v823, %v911
        %913 = vmatmul.bf16.gmra.mxu0 %v430
        %v914 = vpop.f32.mrf.mxu0
        %v915 = vadd.f32 %v826, %v914
        %v916 = vpop.f32.mrf.mxu0
        %v917 = vadd.f32 %v828, %v916
        %918 = vmatmul.bf16.gmra.mxu0 %v432
        %v919 = vpop.f32.mrf.mxu0
        %v920 = vadd.f32 %v831, %v919
        %v921 = vpop.f32.mrf.mxu0
        %v922 = vadd.f32 %v833, %v921
        %923 = vmatmul.bf16.gmra.mxu0 %v434
        %v924 = vpop.f32.mrf.mxu0
        %v925 = vadd.f32 %v836, %v924
        %v926 = vpop.f32.mrf.mxu0
        %v927 = vadd.f32 %v838, %v926
        %928 = vmatmul.bf16.gmra.mxu0 %v436
        %v929 = vpop.f32.mrf.mxu0
        %v930 = vadd.f32 %v841, %v929
        %v931 = vpop.f32.mrf.mxu0
        %v932 = vadd.f32 %v843, %v931
        %933 = vmatmul.bf16.gmra.mxu0 %v438
        %v934 = vpop.f32.mrf.mxu0
        %v935 = vadd.f32 %v846, %v934
        %v936 = vpop.f32.mrf.mxu0
        %v937 = vadd.f32 %v848, %v936
        %938 = vmatmul.bf16.gmra.mxu0 %v440
        %v939 = vpop.f32.mrf.mxu0
        %v940 = vadd.f32 %v851, %v939
        %v941 = vpop.f32.mrf.mxu0
        %v942 = vadd.f32 %v853, %v941
        %943 = vmatmul.bf16.gmra.mxu0 %v442
        %v944 = vpop.f32.mrf.mxu0
        %v945 = vadd.f32 %v856, %v944
        %v946 = vpop.f32.mrf.mxu0
        %v947 = vadd.f32 %v858, %v946
        %948 = vmatmul.bf16.gmra.mxu0 %v444
        %v949 = vpop.f32.mrf.mxu0
        %v950 = vadd.f32 %v861, %v949
        %v951 = vpop.f32.mrf.mxu0
        %v952 = vadd.f32 %v863, %v951
        %953 = vmatmul.bf16.gmra.mxu0 %v446
        %v954 = vpop.f32.mrf.mxu0
        %v955 = vadd.f32 %v866, %v954
        %v956 = vpop.f32.mrf.mxu0
        %v957 = vadd.f32 %v868, %v956
        %958 = vmatmul.bf16.gmra.mxu0 %v448
        %v959 = vpop.f32.mrf.mxu0
        %v960 = vadd.f32 %v871, %v959
        %v961 = vpop.f32.mrf.mxu0
        %v962 = vadd.f32 %v873, %v961
        %963 = vmatmul.bf16.gmra.mxu0 %v450
        %v964 = vpop.f32.mrf.mxu0
        %v965 = vadd.f32 %v876, %v964
        %v966 = vpop.f32.mrf.mxu0
        %v967 = vadd.f32 %v878, %v966
        %968 = vmatmul.bf16.gmra.mxu0 %v452
        %v969 = vpop.f32.mrf.mxu0
        %v970 = vadd.f32 %v881, %v969
        %v971 = vpop.f32.mrf.mxu0
        %v972 = vadd.f32 %v883, %v971
        %973 = vmatmul.bf16.gmra.mxu0 %v454
        %v974 = vpop.f32.mrf.mxu0
        %v975 = vadd.f32 %v886, %v974
        %v976 = vpop.f32.mrf.mxu0
        %v977 = vadd.f32 %v888, %v976
        %978 = vmatmul.bf16.gmra.mxu0 %v456
        %v979 = vpop.f32.mrf.mxu0
        %v980 = vadd.f32 %v891, %v979
        %v981 = vpop.f32.mrf.mxu0
        %v982 = vadd.f32 %v893, %v981
        %983 = vmatmul.bf16.gmra.mxu0 %v458
        %v984 = vpop.f32.mrf.mxu0
        %v985 = vadd.f32 %v896, %v984
        %v986 = vpop.f32.mrf.mxu0
        %v987 = vadd.f32 %v898, %v986
        %988 = vdwg.mxu0
        %989 = vmatpush.bf16.msra.mxu0 %v712
        %990 = vmatpush.bf16.msra.mxu0 %v708
        %991 = vmatpush.bf16.msra.mxu0 %v704
        %992 = vmatpush.bf16.msra.mxu0 %v700
        %993 = vmatpush.bf16.msra.mxu0 %v696
        %994 = vmatpush.bf16.msra.mxu0 %v692
        %995 = vmatpush.bf16.msra.mxu0 %v688
        %996 = vmatpush.bf16.msra.mxu0 %v684
        %997 = vmatmul.bf16.gmra.mxu0 %v427
        %v998 = vpop.f32.mrf.mxu0
        %v999 = vadd.f32 %v324, %v998
        %v1000 = vpop.f32.mrf.mxu0
        %v1001 = vadd.f32 %v324, %v1000
        %1002 = vmatmul.bf16.gmra.mxu0 %v429
        %v1003 = vpop.f32.mrf.mxu0
        %v1004 = vadd.f32 %v324, %v1003
        %v1005 = vpop.f32.mrf.mxu0
        %v1006 = vadd.f32 %v324, %v1005
        %1007 = vmatmul.bf16.gmra.mxu0 %v431
        %v1008 = vpop.f32.mrf.mxu0
        %v1009 = vadd.f32 %v324, %v1008
        %v1010 = vpop.f32.mrf.mxu0
        %v1011 = vadd.f32 %v324, %v1010
        %1012 = vmatmul.bf16.gmra.mxu0 %v433
        %v1013 = vpop.f32.mrf.mxu0
        %v1014 = vadd.f32 %v324, %v1013
        %v1015 = vpop.f32.mrf.mxu0
        %v1016 = vadd.f32 %v324, %v1015
        %1017 = vmatmul.bf16.gmra.mxu0 %v435
        %v1018 = vpop.f32.mrf.mxu0
        %v1019 = vadd.f32 %v324, %v1018
        %v1020 = vpop.f32.mrf.mxu0
        %v1021 = vadd.f32 %v324, %v1020
        %1022 = vmatmul.bf16.gmra.mxu0 %v437
        %v1023 = vpop.f32.mrf.mxu0
        %v1024 = vadd.f32 %v324, %v1023
        %v1025 = vpop.f32.mrf.mxu0
        %v1026 = vadd.f32 %v324, %v1025
        %1027 = vmatmul.bf16.gmra.mxu0 %v439
        %v1028 = vpop.f32.mrf.mxu0
        %v1029 = vadd.f32 %v324, %v1028
        %v1030 = vpop.f32.mrf.mxu0
        %v1031 = vadd.f32 %v324, %v1030
        %1032 = vmatmul.bf16.gmra.mxu0 %v441
        %v1033 = vpop.f32.mrf.mxu0
        %v1034 = vadd.f32 %v324, %v1033
        %v1035 = vpop.f32.mrf.mxu0
        %v1036 = vadd.f32 %v324, %v1035
        %1037 = vmatmul.bf16.gmra.mxu0 %v443
        %v1038 = vpop.f32.mrf.mxu0
        %v1039 = vadd.f32 %v324, %v1038
        %v1040 = vpop.f32.mrf.mxu0
        %v1041 = vadd.f32 %v324, %v1040
        %1042 = vmatmul.bf16.gmra.mxu0 %v445
        %v1043 = vpop.f32.mrf.mxu0
        %v1044 = vadd.f32 %v324, %v1043
        %v1045 = vpop.f32.mrf.mxu0
        %v1046 = vadd.f32 %v324, %v1045
        %1047 = vmatmul.bf16.gmra.mxu0 %v447
        %v1048 = vpop.f32.mrf.mxu0
        %v1049 = vadd.f32 %v324, %v1048
        %v1050 = vpop.f32.mrf.mxu0
        %v1051 = vadd.f32 %v324, %v1050
        %1052 = vmatmul.bf16.gmra.mxu0 %v449
        %v1053 = vpop.f32.mrf.mxu0
        %v1054 = vadd.f32 %v324, %v1053
        %v1055 = vpop.f32.mrf.mxu0
        %v1056 = vadd.f32 %v324, %v1055
        %1057 = vmatmul.bf16.gmra.mxu0 %v451
        %v1058 = vpop.f32.mrf.mxu0
        %v1059 = vadd.f32 %v324, %v1058
        %v1060 = vpop.f32.mrf.mxu0
        %v1061 = vadd.f32 %v324, %v1060
        %1062 = vmatmul.bf16.gmra.mxu0 %v453
        %v1063 = vpop.f32.mrf.mxu0
        %v1064 = vadd.f32 %v324, %v1063
        %v1065 = vpop.f32.mrf.mxu0
        %v1066 = vadd.f32 %v324, %v1065
        %1067 = vmatmul.bf16.gmra.mxu0 %v455
        %v1068 = vpop.f32.mrf.mxu0
        %v1069 = vadd.f32 %v324, %v1068
        %v1070 = vpop.f32.mrf.mxu0
        %v1071 = vadd.f32 %v324, %v1070
        %1072 = vmatmul.bf16.gmra.mxu0 %v457
        %v1073 = vpop.f32.mrf.mxu0
        %v1074 = vadd.f32 %v324, %v1073
        %v1075 = vpop.f32.mrf.mxu0
        %v1076 = vadd.f32 %v324, %v1075
        %1077 = vdwg.mxu0
        %1078 = vmatpush.bf16.msra.mxu0 %v744
        %1079 = vmatpush.bf16.msra.mxu0 %v740
        %1080 = vmatpush.bf16.msra.mxu0 %v736
        %1081 = vmatpush.bf16.msra.mxu0 %v732
        %1082 = vmatpush.bf16.msra.mxu0 %v728
        %1083 = vmatpush.bf16.msra.mxu0 %v724
        %1084 = vmatpush.bf16.msra.mxu0 %v720
        %1085 = vmatpush.bf16.msra.mxu0 %v716
        %1086 = vmatmul.bf16.gmra.mxu0 %v428
        %v1087 = vpop.f32.mrf.mxu0
        %v1088 = vadd.f32 %v999, %v1087
        %v1089 = vpop.f32.mrf.mxu0
        %v1090 = vadd.f32 %v1001, %v1089
        %1091 = vmatmul.bf16.gmra.mxu0 %v430
        %v1092 = vpop.f32.mrf.mxu0
        %v1093 = vadd.f32 %v1004, %v1092
        %v1094 = vpop.f32.mrf.mxu0
        %v1095 = vadd.f32 %v1006, %v1094
        %1096 = vmatmul.bf16.gmra.mxu0 %v432
        %v1097 = vpop.f32.mrf.mxu0
        %v1098 = vadd.f32 %v1009, %v1097
        %v1099 = vpop.f32.mrf.mxu0
        %v1100 = vadd.f32 %v1011, %v1099
        %1101 = vmatmul.bf16.gmra.mxu0 %v434
        %v1102 = vpop.f32.mrf.mxu0
        %v1103 = vadd.f32 %v1014, %v1102
        %v1104 = vpop.f32.mrf.mxu0
        %v1105 = vadd.f32 %v1016, %v1104
        %1106 = vmatmul.bf16.gmra.mxu0 %v436
        %v1107 = vpop.f32.mrf.mxu0
        %v1108 = vadd.f32 %v1019, %v1107
        %v1109 = vpop.f32.mrf.mxu0
        %v1110 = vadd.f32 %v1021, %v1109
        %1111 = vmatmul.bf16.gmra.mxu0 %v438
        %v1112 = vpop.f32.mrf.mxu0
        %v1113 = vadd.f32 %v1024, %v1112
        %v1114 = vpop.f32.mrf.mxu0
        %v1115 = vadd.f32 %v1026, %v1114
        %1116 = vmatmul.bf16.gmra.mxu0 %v440
        %v1117 = vpop.f32.mrf.mxu0
        %v1118 = vadd.f32 %v1029, %v1117
        %v1119 = vpop.f32.mrf.mxu0
        %v1120 = vadd.f32 %v1031, %v1119
        %1121 = vmatmul.bf16.gmra.mxu0 %v442
        %v1122 = vpop.f32.mrf.mxu0
        %v1123 = vadd.f32 %v1034, %v1122
        %v1124 = vpop.f32.mrf.mxu0
        %v1125 = vadd.f32 %v1036, %v1124
        %1126 = vmatmul.bf16.gmra.mxu0 %v444
        %v1127 = vpop.f32.mrf.mxu0
        %v1128 = vadd.f32 %v1039, %v1127
        %v1129 = vpop.f32.mrf.mxu0
        %v1130 = vadd.f32 %v1041, %v1129
        %1131 = vmatmul.bf16.gmra.mxu0 %v446
        %v1132 = vpop.f32.mrf.mxu0
        %v1133 = vadd.f32 %v1044, %v1132
        %v1134 = vpop.f32.mrf.mxu0
        %v1135 = vadd.f32 %v1046, %v1134
        %1136 = vmatmul.bf16.gmra.mxu0 %v448
        %v1137 = vpop.f32.mrf.mxu0
        %v1138 = vadd.f32 %v1049, %v1137
        %v1139 = vpop.f32.mrf.mxu0
        %v1140 = vadd.f32 %v1051, %v1139
        %1141 = vmatmul.bf16.gmra.mxu0 %v450
        %v1142 = vpop.f32.mrf.mxu0
        %v1143 = vadd.f32 %v1054, %v1142
        %v1144 = vpop.f32.mrf.mxu0
        %v1145 = vadd.f32 %v1056, %v1144
        %1146 = vmatmul.bf16.gmra.mxu0 %v452
        %v1147 = vpop.f32.mrf.mxu0
        %v1148 = vadd.f32 %v1059, %v1147
        %v1149 = vpop.f32.mrf.mxu0
        %v1150 = vadd.f32 %v1061, %v1149
        %1151 = vmatmul.bf16.gmra.mxu0 %v454
        %v1152 = vpop.f32.mrf.mxu0
        %v1153 = vadd.f32 %v1064, %v1152
        %v1154 = vpop.f32.mrf.mxu0
        %v1155 = vadd.f32 %v1066, %v1154
        %1156 = vmatmul.bf16.gmra.mxu0 %v456
        %v1157 = vpop.f32.mrf.mxu0
        %v1158 = vadd.f32 %v1069, %v1157
        %v1159 = vpop.f32.mrf.mxu0
        %v1160 = vadd.f32 %v1071, %v1159
        %1161 = vmatmul.bf16.gmra.mxu0 %v458
        %v1162 = vpop.f32.mrf.mxu0
        %v1163 = vadd.f32 %v1074, %v1162
        %v1164 = vpop.f32.mrf.mxu0
        %v1165 = vadd.f32 %v1076, %v1164
        %1166 = vdwg.mxu0
        %1167 = vmatpush.bf16.msra.mxu0 %v713
        %1168 = vmatpush.bf16.msra.mxu0 %v709
        %1169 = vmatpush.bf16.msra.mxu0 %v705
        %1170 = vmatpush.bf16.msra.mxu0 %v701
        %1171 = vmatpush.bf16.msra.mxu0 %v697
        %1172 = vmatpush.bf16.msra.mxu0 %v693
        %1173 = vmatpush.bf16.msra.mxu0 %v689
        %1174 = vmatpush.bf16.msra.mxu0 %v685
        %1175 = vmatmul.bf16.gmra.mxu0 %v427
        %v1176 = vpop.f32.mrf.mxu0
        %v1177 = vadd.f32 %v325, %v1176
        %v1178 = vpop.f32.mrf.mxu0
        %v1179 = vadd.f32 %v325, %v1178
        %1180 = vmatmul.bf16.gmra.mxu0 %v429
        %v1181 = vpop.f32.mrf.mxu0
        %v1182 = vadd.f32 %v325, %v1181
        %v1183 = vpop.f32.mrf.mxu0
        %v1184 = vadd.f32 %v325, %v1183
        %1185 = vmatmul.bf16.gmra.mxu0 %v431
        %v1186 = vpop.f32.mrf.mxu0
        %v1187 = vadd.f32 %v325, %v1186
        %v1188 = vpop.f32.mrf.mxu0
        %v1189 = vadd.f32 %v325, %v1188
        %1190 = vmatmul.bf16.gmra.mxu0 %v433
        %v1191 = vpop.f32.mrf.mxu0
        %v1192 = vadd.f32 %v325, %v1191
        %v1193 = vpop.f32.mrf.mxu0
        %v1194 = vadd.f32 %v325, %v1193
        %1195 = vmatmul.bf16.gmra.mxu0 %v435
        %v1196 = vpop.f32.mrf.mxu0
        %v1197 = vadd.f32 %v325, %v1196
        %v1198 = vpop.f32.mrf.mxu0
        %v1199 = vadd.f32 %v325, %v1198
        %1200 = vmatmul.bf16.gmra.mxu0 %v437
        %v1201 = vpop.f32.mrf.mxu0
        %v1202 = vadd.f32 %v325, %v1201
        %v1203 = vpop.f32.mrf.mxu0
        %v1204 = vadd.f32 %v325, %v1203
        %1205 = vmatmul.bf16.gmra.mxu0 %v439
        %v1206 = vpop.f32.mrf.mxu0
        %v1207 = vadd.f32 %v325, %v1206
        %v1208 = vpop.f32.mrf.mxu0
        %v1209 = vadd.f32 %v325, %v1208
        %1210 = vmatmul.bf16.gmra.mxu0 %v441
        %v1211 = vpop.f32.mrf.mxu0
        %v1212 = vadd.f32 %v325, %v1211
        %v1213 = vpop.f32.mrf.mxu0
        %v1214 = vadd.f32 %v325, %v1213
        %1215 = vmatmul.bf16.gmra.mxu0 %v443
        %v1216 = vpop.f32.mrf.mxu0
        %v1217 = vadd.f32 %v325, %v1216
        %v1218 = vpop.f32.mrf.mxu0
        %v1219 = vadd.f32 %v325, %v1218
        %1220 = vmatmul.bf16.gmra.mxu0 %v445
        %v1221 = vpop.f32.mrf.mxu0
        %v1222 = vadd.f32 %v325, %v1221
        %v1223 = vpop.f32.mrf.mxu0
        %v1224 = vadd.f32 %v325, %v1223
        %1225 = vmatmul.bf16.gmra.mxu0 %v447
        %v1226 = vpop.f32.mrf.mxu0
        %v1227 = vadd.f32 %v325, %v1226
        %v1228 = vpop.f32.mrf.mxu0
        %v1229 = vadd.f32 %v325, %v1228
        %1230 = vmatmul.bf16.gmra.mxu0 %v449
        %v1231 = vpop.f32.mrf.mxu0
        %v1232 = vadd.f32 %v325, %v1231
        %v1233 = vpop.f32.mrf.mxu0
        %v1234 = vadd.f32 %v325, %v1233
        %1235 = vmatmul.bf16.gmra.mxu0 %v451
        %v1236 = vpop.f32.mrf.mxu0
        %v1237 = vadd.f32 %v325, %v1236
        %v1238 = vpop.f32.mrf.mxu0
        %v1239 = vadd.f32 %v325, %v1238
        %1240 = vmatmul.bf16.gmra.mxu0 %v453
        %v1241 = vpop.f32.mrf.mxu0
        %v1242 = vadd.f32 %v325, %v1241
        %v1243 = vpop.f32.mrf.mxu0
        %v1244 = vadd.f32 %v325, %v1243
        %1245 = vmatmul.bf16.gmra.mxu0 %v455
        %v1246 = vpop.f32.mrf.mxu0
        %v1247 = vadd.f32 %v325, %v1246
        %v1248 = vpop.f32.mrf.mxu0
        %v1249 = vadd.f32 %v325, %v1248
        %1250 = vmatmul.bf16.gmra.mxu0 %v457
        %v1251 = vpop.f32.mrf.mxu0
        %v1252 = vadd.f32 %v325, %v1251
        %v1253 = vpop.f32.mrf.mxu0
        %v1254 = vadd.f32 %v325, %v1253
        %1255 = vdwg.mxu0
        %1256 = vmatpush.bf16.msra.mxu0 %v745
        %1257 = vmatpush.bf16.msra.mxu0 %v741
        %1258 = vmatpush.bf16.msra.mxu0 %v737
        %1259 = vmatpush.bf16.msra.mxu0 %v733
        %1260 = vmatpush.bf16.msra.mxu0 %v729
        %1261 = vmatpush.bf16.msra.mxu0 %v725
        %1262 = vmatpush.bf16.msra.mxu0 %v721
        %1263 = vmatpush.bf16.msra.mxu0 %v717
        %1264 = vmatmul.bf16.gmra.mxu0 %v428
        %v1265 = vpop.f32.mrf.mxu0
        %v1266 = vadd.f32 %v1177, %v1265
        %v1267 = vpop.f32.mrf.mxu0
        %v1268 = vadd.f32 %v1179, %v1267
        %1269 = vmatmul.bf16.gmra.mxu0 %v430
        %v1270 = vpop.f32.mrf.mxu0
        %v1271 = vadd.f32 %v1182, %v1270
        %v1272 = vpop.f32.mrf.mxu0
        %v1273 = vadd.f32 %v1184, %v1272
        %1274 = vmatmul.bf16.gmra.mxu0 %v432
        %v1275 = vpop.f32.mrf.mxu0
        %v1276 = vadd.f32 %v1187, %v1275
        %v1277 = vpop.f32.mrf.mxu0
        %v1278 = vadd.f32 %v1189, %v1277
        %1279 = vmatmul.bf16.gmra.mxu0 %v434
        %v1280 = vpop.f32.mrf.mxu0
        %v1281 = vadd.f32 %v1192, %v1280
        %v1282 = vpop.f32.mrf.mxu0
        %v1283 = vadd.f32 %v1194, %v1282
        %1284 = vmatmul.bf16.gmra.mxu0 %v436
        %v1285 = vpop.f32.mrf.mxu0
        %v1286 = vadd.f32 %v1197, %v1285
        %v1287 = vpop.f32.mrf.mxu0
        %v1288 = vadd.f32 %v1199, %v1287
        %1289 = vmatmul.bf16.gmra.mxu0 %v438
        %v1290 = vpop.f32.mrf.mxu0
        %v1291 = vadd.f32 %v1202, %v1290
        %v1292 = vpop.f32.mrf.mxu0
        %v1293 = vadd.f32 %v1204, %v1292
        %1294 = vmatmul.bf16.gmra.mxu0 %v440
        %v1295 = vpop.f32.mrf.mxu0
        %v1296 = vadd.f32 %v1207, %v1295
        %v1297 = vpop.f32.mrf.mxu0
        %v1298 = vadd.f32 %v1209, %v1297
        %1299 = vmatmul.bf16.gmra.mxu0 %v442
        %v1300 = vpop.f32.mrf.mxu0
        %v1301 = vadd.f32 %v1212, %v1300
        %v1302 = vpop.f32.mrf.mxu0
        %v1303 = vadd.f32 %v1214, %v1302
        %1304 = vmatmul.bf16.gmra.mxu0 %v444
        %v1305 = vpop.f32.mrf.mxu0
        %v1306 = vadd.f32 %v1217, %v1305
        %v1307 = vpop.f32.mrf.mxu0
        %v1308 = vadd.f32 %v1219, %v1307
        %1309 = vmatmul.bf16.gmra.mxu0 %v446
        %v1310 = vpop.f32.mrf.mxu0
        %v1311 = vadd.f32 %v1222, %v1310
        %v1312 = vpop.f32.mrf.mxu0
        %v1313 = vadd.f32 %v1224, %v1312
        %1314 = vmatmul.bf16.gmra.mxu0 %v448
        %v1315 = vpop.f32.mrf.mxu0
        %v1316 = vadd.f32 %v1227, %v1315
        %v1317 = vpop.f32.mrf.mxu0
        %v1318 = vadd.f32 %v1229, %v1317
        %1319 = vmatmul.bf16.gmra.mxu0 %v450
        %v1320 = vpop.f32.mrf.mxu0
        %v1321 = vadd.f32 %v1232, %v1320
        %v1322 = vpop.f32.mrf.mxu0
        %v1323 = vadd.f32 %v1234, %v1322
        %1324 = vmatmul.bf16.gmra.mxu0 %v452
        %v1325 = vpop.f32.mrf.mxu0
        %v1326 = vadd.f32 %v1237, %v1325
        %v1327 = vpop.f32.mrf.mxu0
        %v1328 = vadd.f32 %v1239, %v1327
        %1329 = vmatmul.bf16.gmra.mxu0 %v454
        %v1330 = vpop.f32.mrf.mxu0
        %v1331 = vadd.f32 %v1242, %v1330
        %v1332 = vpop.f32.mrf.mxu0
        %v1333 = vadd.f32 %v1244, %v1332
        %1334 = vmatmul.bf16.gmra.mxu0 %v456
        %v1335 = vpop.f32.mrf.mxu0
        %v1336 = vadd.f32 %v1247, %v1335
        %v1337 = vpop.f32.mrf.mxu0
        %v1338 = vadd.f32 %v1249, %v1337
        %1339 = vmatmul.bf16.gmra.mxu0 %v458
        %v1340 = vpop.f32.mrf.mxu0
        %v1341 = vadd.f32 %v1252, %v1340
        %v1342 = vpop.f32.mrf.mxu0
        %v1343 = vadd.f32 %v1254, %v1342
        %1344 = vdwg.mxu0
        %1345 = vmatpush.bf16.msra.mxu0 %v714
        %1346 = vmatpush.bf16.msra.mxu0 %v710
        %1347 = vmatpush.bf16.msra.mxu0 %v706
        %1348 = vmatpush.bf16.msra.mxu0 %v702
        %1349 = vmatpush.bf16.msra.mxu0 %v698
        %1350 = vmatpush.bf16.msra.mxu0 %v694
        %1351 = vmatpush.bf16.msra.mxu0 %v690
        %1352 = vmatpush.bf16.msra.mxu0 %v686
        %1353 = vmatmul.bf16.gmra.mxu0 %v427
        %v1354 = vpop.f32.mrf.mxu0
        %v1355 = vadd.f32 %v326, %v1354
        %v1356 = vpop.f32.mrf.mxu0
        %v1357 = vadd.f32 %v326, %v1356
        %1358 = vmatmul.bf16.gmra.mxu0 %v429
        %v1359 = vpop.f32.mrf.mxu0
        %v1360 = vadd.f32 %v326, %v1359
        %v1361 = vpop.f32.mrf.mxu0
        %v1362 = vadd.f32 %v326, %v1361
        %1363 = vmatmul.bf16.gmra.mxu0 %v431
        %v1364 = vpop.f32.mrf.mxu0
        %v1365 = vadd.f32 %v326, %v1364
        %v1366 = vpop.f32.mrf.mxu0
        %v1367 = vadd.f32 %v326, %v1366
        %1368 = vmatmul.bf16.gmra.mxu0 %v433
        %v1369 = vpop.f32.mrf.mxu0
        %v1370 = vadd.f32 %v326, %v1369
        %v1371 = vpop.f32.mrf.mxu0
        %v1372 = vadd.f32 %v326, %v1371
        %1373 = vmatmul.bf16.gmra.mxu0 %v435
        %v1374 = vpop.f32.mrf.mxu0
        %v1375 = vadd.f32 %v326, %v1374
        %v1376 = vpop.f32.mrf.mxu0
        %v1377 = vadd.f32 %v326, %v1376
        %1378 = vmatmul.bf16.gmra.mxu0 %v437
        %v1379 = vpop.f32.mrf.mxu0
        %v1380 = vadd.f32 %v326, %v1379
        %v1381 = vpop.f32.mrf.mxu0
        %v1382 = vadd.f32 %v326, %v1381
        %1383 = vmatmul.bf16.gmra.mxu0 %v439
        %v1384 = vpop.f32.mrf.mxu0
        %v1385 = vadd.f32 %v326, %v1384
        %v1386 = vpop.f32.mrf.mxu0
        %v1387 = vadd.f32 %v326, %v1386
        %1388 = vmatmul.bf16.gmra.mxu0 %v441
        %v1389 = vpop.f32.mrf.mxu0
        %v1390 = vadd.f32 %v326, %v1389
        %v1391 = vpop.f32.mrf.mxu0
        %v1392 = vadd.f32 %v326, %v1391
        %1393 = vmatmul.bf16.gmra.mxu0 %v443
        %v1394 = vpop.f32.mrf.mxu0
        %v1395 = vadd.f32 %v326, %v1394
        %v1396 = vpop.f32.mrf.mxu0
        %v1397 = vadd.f32 %v326, %v1396
        %1398 = vmatmul.bf16.gmra.mxu0 %v445
        %v1399 = vpop.f32.mrf.mxu0
        %v1400 = vadd.f32 %v326, %v1399
        %v1401 = vpop.f32.mrf.mxu0
        %v1402 = vadd.f32 %v326, %v1401
        %1403 = vmatmul.bf16.gmra.mxu0 %v447
        %v1404 = vpop.f32.mrf.mxu0
        %v1405 = vadd.f32 %v326, %v1404
        %v1406 = vpop.f32.mrf.mxu0
        %v1407 = vadd.f32 %v326, %v1406
        %1408 = vmatmul.bf16.gmra.mxu0 %v449
        %v1409 = vpop.f32.mrf.mxu0
        %v1410 = vadd.f32 %v326, %v1409
        %v1411 = vpop.f32.mrf.mxu0
        %v1412 = vadd.f32 %v326, %v1411
        %1413 = vmatmul.bf16.gmra.mxu0 %v451
        %v1414 = vpop.f32.mrf.mxu0
        %v1415 = vadd.f32 %v326, %v1414
        %v1416 = vpop.f32.mrf.mxu0
        %v1417 = vadd.f32 %v326, %v1416
        %1418 = vmatmul.bf16.gmra.mxu0 %v453
        %v1419 = vpop.f32.mrf.mxu0
        %v1420 = vadd.f32 %v326, %v1419
        %v1421 = vpop.f32.mrf.mxu0
        %v1422 = vadd.f32 %v326, %v1421
        %1423 = vmatmul.bf16.gmra.mxu0 %v455
        %v1424 = vpop.f32.mrf.mxu0
        %v1425 = vadd.f32 %v326, %v1424
        %v1426 = vpop.f32.mrf.mxu0
        %v1427 = vadd.f32 %v326, %v1426
        %1428 = vmatmul.bf16.gmra.mxu0 %v457
        %v1429 = vpop.f32.mrf.mxu0
        %v1430 = vadd.f32 %v326, %v1429
        %v1431 = vpop.f32.mrf.mxu0
        %v1432 = vadd.f32 %v326, %v1431
        %1433 = vdwg.mxu0
        %1434 = vmatpush.bf16.msra.mxu0 %v746
        %1435 = vmatpush.bf16.msra.mxu0 %v742
        %1436 = vmatpush.bf16.msra.mxu0 %v738
        %1437 = vmatpush.bf16.msra.mxu0 %v734
        %1438 = vmatpush.bf16.msra.mxu0 %v730
        %1439 = vmatpush.bf16.msra.mxu0 %v726
        %1440 = vmatpush.bf16.msra.mxu0 %v722
        %1441 = vmatpush.bf16.msra.mxu0 %v718
        %1442 = vmatmul.bf16.gmra.mxu0 %v428
        %v1443 = vpop.f32.mrf.mxu0
        %v1444 = vadd.f32 %v1355, %v1443
        %v1445 = vpop.f32.mrf.mxu0
        %v1446 = vadd.f32 %v1357, %v1445
        %1447 = vmatmul.bf16.gmra.mxu0 %v430
        %v1448 = vpop.f32.mrf.mxu0
        %v1449 = vadd.f32 %v1360, %v1448
        %v1450 = vpop.f32.mrf.mxu0
        %v1451 = vadd.f32 %v1362, %v1450
        %1452 = vmatmul.bf16.gmra.mxu0 %v432
        %v1453 = vpop.f32.mrf.mxu0
        %v1454 = vadd.f32 %v1365, %v1453
        %v1455 = vpop.f32.mrf.mxu0
        %v1456 = vadd.f32 %v1367, %v1455
        %1457 = vmatmul.bf16.gmra.mxu0 %v434
        %v1458 = vpop.f32.mrf.mxu0
        %v1459 = vadd.f32 %v1370, %v1458
        %v1460 = vpop.f32.mrf.mxu0
        %v1461 = vadd.f32 %v1372, %v1460
        %1462 = vmatmul.bf16.gmra.mxu0 %v436
        %v1463 = vpop.f32.mrf.mxu0
        %v1464 = vadd.f32 %v1375, %v1463
        %v1465 = vpop.f32.mrf.mxu0
        %v1466 = vadd.f32 %v1377, %v1465
        %1467 = vmatmul.bf16.gmra.mxu0 %v438
        %v1468 = vpop.f32.mrf.mxu0
        %v1469 = vadd.f32 %v1380, %v1468
        %v1470 = vpop.f32.mrf.mxu0
        %v1471 = vadd.f32 %v1382, %v1470
        %1472 = vmatmul.bf16.gmra.mxu0 %v440
        %v1473 = vpop.f32.mrf.mxu0
        %v1474 = vadd.f32 %v1385, %v1473
        %v1475 = vpop.f32.mrf.mxu0
        %v1476 = vadd.f32 %v1387, %v1475
        %1477 = vmatmul.bf16.gmra.mxu0 %v442
        %v1478 = vpop.f32.mrf.mxu0
        %v1479 = vadd.f32 %v1390, %v1478
        %v1480 = vpop.f32.mrf.mxu0
        %v1481 = vadd.f32 %v1392, %v1480
        %1482 = vmatmul.bf16.gmra.mxu0 %v444
        %v1483 = vpop.f32.mrf.mxu0
        %v1484 = vadd.f32 %v1395, %v1483
        %v1485 = vpop.f32.mrf.mxu0
        %v1486 = vadd.f32 %v1397, %v1485
        %1487 = vmatmul.bf16.gmra.mxu0 %v446
        %v1488 = vpop.f32.mrf.mxu0
        %v1489 = vadd.f32 %v1400, %v1488
        %v1490 = vpop.f32.mrf.mxu0
        %v1491 = vadd.f32 %v1402, %v1490
        %1492 = vmatmul.bf16.gmra.mxu0 %v448
        %v1493 = vpop.f32.mrf.mxu0
        %v1494 = vadd.f32 %v1405, %v1493
        %v1495 = vpop.f32.mrf.mxu0
        %v1496 = vadd.f32 %v1407, %v1495
        %1497 = vmatmul.bf16.gmra.mxu0 %v450
        %v1498 = vpop.f32.mrf.mxu0
        %v1499 = vadd.f32 %v1410, %v1498
        %v1500 = vpop.f32.mrf.mxu0
        %v1501 = vadd.f32 %v1412, %v1500
        %1502 = vmatmul.bf16.gmra.mxu0 %v452
        %v1503 = vpop.f32.mrf.mxu0
        %v1504 = vadd.f32 %v1415, %v1503
        %v1505 = vpop.f32.mrf.mxu0
        %v1506 = vadd.f32 %v1417, %v1505
        %1507 = vmatmul.bf16.gmra.mxu0 %v454
        %v1508 = vpop.f32.mrf.mxu0
        %v1509 = vadd.f32 %v1420, %v1508
        %v1510 = vpop.f32.mrf.mxu0
        %v1511 = vadd.f32 %v1422, %v1510
        %1512 = vmatmul.bf16.gmra.mxu0 %v456
        %v1513 = vpop.f32.mrf.mxu0
        %v1514 = vadd.f32 %v1425, %v1513
        %v1515 = vpop.f32.mrf.mxu0
        %v1516 = vadd.f32 %v1427, %v1515
        %1517 = vmatmul.bf16.gmra.mxu0 %v458
        %v1518 = vpop.f32.mrf.mxu0
        %v1519 = vadd.f32 %v1430, %v1518
        %v1520 = vpop.f32.mrf.mxu0
        %v1521 = vadd.f32 %v1432, %v1520
        %1522 = vdwg.mxu0
        %v1523 = vxor.u32 %v910, 2147483648
        %v1524 = vxor.u32 %v1088, 2147483648
        %v1525 = vxor.u32 %v912, 2147483648
        %v1526 = vxor.u32 %v1090, 2147483648
        %v1527 = vxor.u32 %v915, 2147483648
        %v1528 = vxor.u32 %v1093, 2147483648
        %v1529 = vxor.u32 %v917, 2147483648
        %v1530 = vxor.u32 %v1095, 2147483648
        %v1531 = vxor.u32 %v920, 2147483648
        %v1532 = vxor.u32 %v1098, 2147483648
        %v1533 = vxor.u32 %v922, 2147483648
        %v1534 = vxor.u32 %v1100, 2147483648
        %v1535 = vxor.u32 %v925, 2147483648
        %v1536 = vxor.u32 %v1103, 2147483648
        %v1537 = vxor.u32 %v927, 2147483648
        %v1538 = vxor.u32 %v1105, 2147483648
        %v1539 = vxor.u32 %v930, 2147483648
        %v1540 = vxor.u32 %v1108, 2147483648
        %v1541 = vxor.u32 %v932, 2147483648
        %v1542 = vxor.u32 %v1110, 2147483648
        %v1543 = vxor.u32 %v935, 2147483648
        %v1544 = vxor.u32 %v1113, 2147483648
        %v1545 = vxor.u32 %v937, 2147483648
        %v1546 = vxor.u32 %v1115, 2147483648
        %v1547 = vxor.u32 %v940, 2147483648
        %v1548 = vxor.u32 %v1118, 2147483648
        %v1549 = vxor.u32 %v942, 2147483648
        %v1550 = vxor.u32 %v1120, 2147483648
        %v1551 = vxor.u32 %v945, 2147483648
        %v1552 = vxor.u32 %v1123, 2147483648
        %v1553 = vxor.u32 %v947, 2147483648
        %v1554 = vxor.u32 %v1125, 2147483648
        %v1555 = vxor.u32 %v950, 2147483648
        %v1556 = vxor.u32 %v1128, 2147483648
        %v1557 = vxor.u32 %v952, 2147483648
        %v1558 = vxor.u32 %v1130, 2147483648
        %v1559 = vxor.u32 %v955, 2147483648
        %v1560 = vxor.u32 %v1133, 2147483648
        %v1561 = vxor.u32 %v957, 2147483648
        %v1562 = vxor.u32 %v1135, 2147483648
        %v1563 = vxor.u32 %v960, 2147483648
        %v1564 = vxor.u32 %v1138, 2147483648
        %v1565 = vxor.u32 %v962, 2147483648
        %v1566 = vxor.u32 %v1140, 2147483648
        %v1567 = vxor.u32 %v965, 2147483648
        %v1568 = vxor.u32 %v1143, 2147483648
        %v1569 = vxor.u32 %v967, 2147483648
        %v1570 = vxor.u32 %v1145, 2147483648
        %v1571 = vxor.u32 %v970, 2147483648
        %v1572 = vxor.u32 %v1148, 2147483648
        %v1573 = vxor.u32 %v972, 2147483648
        %v1574 = vxor.u32 %v1150, 2147483648
        %v1575 = vxor.u32 %v975, 2147483648
        %v1576 = vxor.u32 %v1153, 2147483648
        %v1577 = vxor.u32 %v977, 2147483648
        %v1578 = vxor.u32 %v1155, 2147483648
        %v1579 = vxor.u32 %v980, 2147483648
        %v1580 = vxor.u32 %v1158, 2147483648
        %v1581 = vxor.u32 %v982, 2147483648
        %v1582 = vxor.u32 %v1160, 2147483648
        %v1583 = vxor.u32 %v985, 2147483648
        %v1584 = vxor.u32 %v1163, 2147483648
        %v1585 = vxor.u32 %v987, 2147483648
        %v1586 = vxor.u32 %v1165, 2147483648
        %v1587 = vmul.f32 %v1523, 1.442695
        %v1588 = vpow.pop %v1587
        %v1589 = vmul.f32 %v1524, 1.442695
        %v1590 = vpow.pop %v1589
        %v1591 = vmul.f32 %v1525, 1.442695
        %v1592 = vpow.pop %v1591
        %v1593 = vmul.f32 %v1526, 1.442695
        %v1594 = vpow.pop %v1593
        %v1595 = vmul.f32 %v1527, 1.442695
        %v1596 = vpow.pop %v1595
        %v1597 = vmul.f32 %v1528, 1.442695
        %v1598 = vpow.pop %v1597
        %v1599 = vmul.f32 %v1529, 1.442695
        %v1600 = vpow.pop %v1599
        %v1601 = vmul.f32 %v1530, 1.442695
        %v1602 = vpow.pop %v1601
        %v1603 = vmul.f32 %v1531, 1.442695
        %v1604 = vpow.pop %v1603
        %v1605 = vmul.f32 %v1532, 1.442695
        %v1606 = vpow.pop %v1605
        %v1607 = vmul.f32 %v1533, 1.442695
        %v1608 = vpow.pop %v1607
        %v1609 = vmul.f32 %v1534, 1.442695
        %v1610 = vpow.pop %v1609
        %v1611 = vmul.f32 %v1535, 1.442695
        %v1612 = vpow.pop %v1611
        %v1613 = vmul.f32 %v1536, 1.442695
        %v1614 = vpow.pop %v1613
        %v1615 = vmul.f32 %v1537, 1.442695
        %v1616 = vpow.pop %v1615
        %v1617 = vmul.f32 %v1538, 1.442695
        %v1618 = vpow.pop %v1617
        %v1619 = vmul.f32 %v1539, 1.442695
        %v1620 = vpow.pop %v1619
        %v1621 = vmul.f32 %v1540, 1.442695
        %v1622 = vpow.pop %v1621
        %v1623 = vmul.f32 %v1541, 1.442695
        %v1624 = vpow.pop %v1623
        %v1625 = vmul.f32 %v1542, 1.442695
        %v1626 = vpow.pop %v1625
        %v1627 = vmul.f32 %v1543, 1.442695
        %v1628 = vpow.pop %v1627
        %v1629 = vmul.f32 %v1544, 1.442695
        %v1630 = vpow.pop %v1629
        %v1631 = vmul.f32 %v1545, 1.442695
        %v1632 = vpow.pop %v1631
        %v1633 = vmul.f32 %v1546, 1.442695
        %v1634 = vpow.pop %v1633
        %v1635 = vmul.f32 %v1547, 1.442695
        %v1636 = vpow.pop %v1635
        %v1637 = vmul.f32 %v1548, 1.442695
        %v1638 = vpow.pop %v1637
        %v1639 = vmul.f32 %v1549, 1.442695
        %v1640 = vpow.pop %v1639
        %v1641 = vmul.f32 %v1550, 1.442695
        %v1642 = vpow.pop %v1641
        %v1643 = vmul.f32 %v1551, 1.442695
        %v1644 = vpow.pop %v1643
        %v1645 = vmul.f32 %v1552, 1.442695
        %v1646 = vpow.pop %v1645
        %v1647 = vmul.f32 %v1553, 1.442695
        %v1648 = vpow.pop %v1647
        %v1649 = vmul.f32 %v1554, 1.442695
        %v1650 = vpow.pop %v1649
        %v1651 = vmul.f32 %v1555, 1.442695
        %v1652 = vpow.pop %v1651
        %v1653 = vmul.f32 %v1556, 1.442695
        %v1654 = vpow.pop %v1653
        %v1655 = vmul.f32 %v1557, 1.442695
        %v1656 = vpow.pop %v1655
        %v1657 = vmul.f32 %v1558, 1.442695
        %v1658 = vpow.pop %v1657
        %v1659 = vmul.f32 %v1559, 1.442695
        %v1660 = vpow.pop %v1659
        %v1661 = vmul.f32 %v1560, 1.442695
        %v1662 = vpow.pop %v1661
        %v1663 = vmul.f32 %v1561, 1.442695
        %v1664 = vpow.pop %v1663
        %v1665 = vmul.f32 %v1562, 1.442695
        %v1666 = vpow.pop %v1665
        %v1667 = vmul.f32 %v1563, 1.442695
        %v1668 = vpow.pop %v1667
        %v1669 = vmul.f32 %v1564, 1.442695
        %v1670 = vpow.pop %v1669
        %v1671 = vmul.f32 %v1565, 1.442695
        %v1672 = vpow.pop %v1671
        %v1673 = vmul.f32 %v1566, 1.442695
        %v1674 = vpow.pop %v1673
        %v1675 = vmul.f32 %v1567, 1.442695
        %v1676 = vpow.pop %v1675
        %v1677 = vmul.f32 %v1568, 1.442695
        %v1678 = vpow.pop %v1677
        %v1679 = vmul.f32 %v1569, 1.442695
        %v1680 = vpow.pop %v1679
        %v1681 = vmul.f32 %v1570, 1.442695
        %v1682 = vpow.pop %v1681
        %v1683 = vmul.f32 %v1571, 1.442695
        %v1684 = vpow.pop %v1683
        %v1685 = vmul.f32 %v1572, 1.442695
        %v1686 = vpow.pop %v1685
        %v1687 = vmul.f32 %v1573, 1.442695
        %v1688 = vpow.pop %v1687
        %v1689 = vmul.f32 %v1574, 1.442695
        %v1690 = vpow.pop %v1689
        %v1691 = vmul.f32 %v1575, 1.442695
        %v1692 = vpow.pop %v1691
        %v1693 = vmul.f32 %v1576, 1.442695
        %v1694 = vpow.pop %v1693
        %v1695 = vmul.f32 %v1577, 1.442695
        %v1696 = vpow.pop %v1695
        %v1697 = vmul.f32 %v1578, 1.442695
        %v1698 = vpow.pop %v1697
        %v1699 = vmul.f32 %v1579, 1.442695
        %v1700 = vpow.pop %v1699
        %v1701 = vmul.f32 %v1580, 1.442695
        %v1702 = vpow.pop %v1701
        %v1703 = vmul.f32 %v1581, 1.442695
        %v1704 = vpow.pop %v1703
        %v1705 = vmul.f32 %v1582, 1.442695
        %v1706 = vpow.pop %v1705
        %v1707 = vmul.f32 %v1583, 1.442695
        %v1708 = vpow.pop %v1707
        %v1709 = vmul.f32 %v1584, 1.442695
        %v1710 = vpow.pop %v1709
        %v1711 = vmul.f32 %v1585, 1.442695
        %v1712 = vpow.pop %v1711
        %v1713 = vmul.f32 %v1586, 1.442695
        %v1714 = vpow.pop %v1713
        %v1715 = vadd.f32 %v1588, 1.0
        %v1716 = vadd.f32 %v1590, 1.0
        %v1717 = vadd.f32 %v1592, 1.0
        %v1718 = vadd.f32 %v1594, 1.0
        %v1719 = vadd.f32 %v1596, 1.0
        %v1720 = vadd.f32 %v1598, 1.0
        %v1721 = vadd.f32 %v1600, 1.0
        %v1722 = vadd.f32 %v1602, 1.0
        %v1723 = vadd.f32 %v1604, 1.0
        %v1724 = vadd.f32 %v1606, 1.0
        %v1725 = vadd.f32 %v1608, 1.0
        %v1726 = vadd.f32 %v1610, 1.0
        %v1727 = vadd.f32 %v1612, 1.0
        %v1728 = vadd.f32 %v1614, 1.0
        %v1729 = vadd.f32 %v1616, 1.0
        %v1730 = vadd.f32 %v1618, 1.0
        %v1731 = vadd.f32 %v1620, 1.0
        %v1732 = vadd.f32 %v1622, 1.0
        %v1733 = vadd.f32 %v1624, 1.0
        %v1734 = vadd.f32 %v1626, 1.0
        %v1735 = vadd.f32 %v1628, 1.0
        %v1736 = vadd.f32 %v1630, 1.0
        %v1737 = vadd.f32 %v1632, 1.0
        %v1738 = vadd.f32 %v1634, 1.0
        %v1739 = vadd.f32 %v1636, 1.0
        %v1740 = vadd.f32 %v1638, 1.0
        %v1741 = vadd.f32 %v1640, 1.0
        %v1742 = vadd.f32 %v1642, 1.0
        %v1743 = vadd.f32 %v1644, 1.0
        %v1744 = vadd.f32 %v1646, 1.0
        %v1745 = vadd.f32 %v1648, 1.0
        %v1746 = vadd.f32 %v1650, 1.0
        %v1747 = vadd.f32 %v1652, 1.0
        %v1748 = vadd.f32 %v1654, 1.0
        %v1749 = vadd.f32 %v1656, 1.0
        %v1750 = vadd.f32 %v1658, 1.0
        %v1751 = vadd.f32 %v1660, 1.0
        %v1752 = vadd.f32 %v1662, 1.0
        %v1753 = vadd.f32 %v1664, 1.0
        %v1754 = vadd.f32 %v1666, 1.0
        %v1755 = vadd.f32 %v1668, 1.0
        %v1756 = vadd.f32 %v1670, 1.0
        %v1757 = vadd.f32 %v1672, 1.0
        %v1758 = vadd.f32 %v1674, 1.0
        %v1759 = vadd.f32 %v1676, 1.0
        %v1760 = vadd.f32 %v1678, 1.0
        %v1761 = vadd.f32 %v1680, 1.0
        %v1762 = vadd.f32 %v1682, 1.0
        %v1763 = vadd.f32 %v1684, 1.0
        %v1764 = vadd.f32 %v1686, 1.0
        %v1765 = vadd.f32 %v1688, 1.0
        %v1766 = vadd.f32 %v1690, 1.0
        %v1767 = vadd.f32 %v1692, 1.0
        %v1768 = vadd.f32 %v1694, 1.0
        %v1769 = vadd.f32 %v1696, 1.0
        %v1770 = vadd.f32 %v1698, 1.0
        %v1771 = vadd.f32 %v1700, 1.0
        %v1772 = vadd.f32 %v1702, 1.0
        %v1773 = vadd.f32 %v1704, 1.0
        %v1774 = vadd.f32 %v1706, 1.0
        %v1775 = vadd.f32 %v1708, 1.0
        %v1776 = vadd.f32 %v1710, 1.0
        %v1777 = vadd.f32 %v1712, 1.0
        %v1778 = vadd.f32 %v1714, 1.0
        %v1779 = vrcp.pop %v1715
        %v1780 = vmul.f32 %v1715, %v1779
        %v1781 = vsub.f32 1.0, %v1780
        %v1782 = vmul.f32 %v1779, %v1781
        %v1783 = vadd.f32 %v1779, %v1782
        %vm1784 = vweird.f32 %v1715
        %vm1785 = vweird.f32 %v1779
        %vm1786 = vmor %vm1784, %vm1785
        %v1787 = vsel %vm1786, %v1779, %v1783
        %v1788 = vand.u32 2147483647, %v1715
        %vm1789 = vcmp.eq.f32.partialorder %v1788, 8.507059e+37
        %v1790 = vand.u32 %v1715, 2147483648
        %v1791 = vor.u32 1.1754944e-38, %v1790
        %v1792 = vsel %vm1789, %v1791, %v1787
        %v1793 = vmul.f32 1.0, %v1792
        %v1794 = vrcp.pop %v1716
        %v1795 = vmul.f32 %v1716, %v1794
        %v1796 = vsub.f32 1.0, %v1795
        %v1797 = vmul.f32 %v1794, %v1796
        %v1798 = vadd.f32 %v1794, %v1797
        %vm1799 = vweird.f32 %v1716
        %vm1800 = vweird.f32 %v1794
        %vm1801 = vmor %vm1799, %vm1800
        %v1802 = vsel %vm1801, %v1794, %v1798
        %v1803 = vand.u32 2147483647, %v1716
        %vm1804 = vcmp.eq.f32.partialorder %v1803, 8.507059e+37
        %v1805 = vand.u32 %v1716, 2147483648
        %v1806 = vor.u32 1.1754944e-38, %v1805
        %v1807 = vsel %vm1804, %v1806, %v1802
        %v1808 = vmul.f32 1.0, %v1807
        %v1809 = vrcp.pop %v1717
        %v1810 = vmul.f32 %v1717, %v1809
        %v1811 = vsub.f32 1.0, %v1810
        %v1812 = vmul.f32 %v1809, %v1811
        %v1813 = vadd.f32 %v1809, %v1812
        %vm1814 = vweird.f32 %v1717
        %vm1815 = vweird.f32 %v1809
        %vm1816 = vmor %vm1814, %vm1815
        %v1817 = vsel %vm1816, %v1809, %v1813
        %v1818 = vand.u32 2147483647, %v1717
        %vm1819 = vcmp.eq.f32.partialorder %v1818, 8.507059e+37
        %v1820 = vand.u32 %v1717, 2147483648
        %v1821 = vor.u32 1.1754944e-38, %v1820
        %v1822 = vsel %vm1819, %v1821, %v1817
        %v1823 = vmul.f32 1.0, %v1822
        %v1824 = vrcp.pop %v1718
        %v1825 = vmul.f32 %v1718, %v1824
        %v1826 = vsub.f32 1.0, %v1825
        %v1827 = vmul.f32 %v1824, %v1826
        %v1828 = vadd.f32 %v1824, %v1827
        %vm1829 = vweird.f32 %v1718
        %vm1830 = vweird.f32 %v1824
        %vm1831 = vmor %vm1829, %vm1830
        %v1832 = vsel %vm1831, %v1824, %v1828
        %v1833 = vand.u32 2147483647, %v1718
        %vm1834 = vcmp.eq.f32.partialorder %v1833, 8.507059e+37
        %v1835 = vand.u32 %v1718, 2147483648
        %v1836 = vor.u32 1.1754944e-38, %v1835
        %v1837 = vsel %vm1834, %v1836, %v1832
        %v1838 = vmul.f32 1.0, %v1837
        %v1839 = vrcp.pop %v1719
        %v1840 = vmul.f32 %v1719, %v1839
        %v1841 = vsub.f32 1.0, %v1840
        %v1842 = vmul.f32 %v1839, %v1841
        %v1843 = vadd.f32 %v1839, %v1842
        %vm1844 = vweird.f32 %v1719
        %vm1845 = vweird.f32 %v1839
        %vm1846 = vmor %vm1844, %vm1845
        %v1847 = vsel %vm1846, %v1839, %v1843
        %v1848 = vand.u32 2147483647, %v1719
        %vm1849 = vcmp.eq.f32.partialorder %v1848, 8.507059e+37
        %v1850 = vand.u32 %v1719, 2147483648
        %v1851 = vor.u32 1.1754944e-38, %v1850
        %v1852 = vsel %vm1849, %v1851, %v1847
        %v1853 = vmul.f32 1.0, %v1852
        %v1854 = vrcp.pop %v1720
        %v1855 = vmul.f32 %v1720, %v1854
        %v1856 = vsub.f32 1.0, %v1855
        %v1857 = vmul.f32 %v1854, %v1856
        %v1858 = vadd.f32 %v1854, %v1857
        %vm1859 = vweird.f32 %v1720
        %vm1860 = vweird.f32 %v1854
        %vm1861 = vmor %vm1859, %vm1860
        %v1862 = vsel %vm1861, %v1854, %v1858
        %v1863 = vand.u32 2147483647, %v1720
        %vm1864 = vcmp.eq.f32.partialorder %v1863, 8.507059e+37
        %v1865 = vand.u32 %v1720, 2147483648
        %v1866 = vor.u32 1.1754944e-38, %v1865
        %v1867 = vsel %vm1864, %v1866, %v1862
        %v1868 = vmul.f32 1.0, %v1867
        %v1869 = vrcp.pop %v1721
        %v1870 = vmul.f32 %v1721, %v1869
        %v1871 = vsub.f32 1.0, %v1870
        %v1872 = vmul.f32 %v1869, %v1871
        %v1873 = vadd.f32 %v1869, %v1872
        %vm1874 = vweird.f32 %v1721
        %vm1875 = vweird.f32 %v1869
        %vm1876 = vmor %vm1874, %vm1875
        %v1877 = vsel %vm1876, %v1869, %v1873
        %v1878 = vand.u32 2147483647, %v1721
        %vm1879 = vcmp.eq.f32.partialorder %v1878, 8.507059e+37
        %v1880 = vand.u32 %v1721, 2147483648
        %v1881 = vor.u32 1.1754944e-38, %v1880
        %v1882 = vsel %vm1879, %v1881, %v1877
        %v1883 = vmul.f32 1.0, %v1882
        %v1884 = vrcp.pop %v1722
        %v1885 = vmul.f32 %v1722, %v1884
        %v1886 = vsub.f32 1.0, %v1885
        %v1887 = vmul.f32 %v1884, %v1886
        %v1888 = vadd.f32 %v1884, %v1887
        %vm1889 = vweird.f32 %v1722
        %vm1890 = vweird.f32 %v1884
        %vm1891 = vmor %vm1889, %vm1890
        %v1892 = vsel %vm1891, %v1884, %v1888
        %v1893 = vand.u32 2147483647, %v1722
        %vm1894 = vcmp.eq.f32.partialorder %v1893, 8.507059e+37
        %v1895 = vand.u32 %v1722, 2147483648
        %v1896 = vor.u32 1.1754944e-38, %v1895
        %v1897 = vsel %vm1894, %v1896, %v1892
        %v1898 = vmul.f32 1.0, %v1897
        %v1899 = vrcp.pop %v1723
        %v1900 = vmul.f32 %v1723, %v1899
        %v1901 = vsub.f32 1.0, %v1900
        %v1902 = vmul.f32 %v1899, %v1901
        %v1903 = vadd.f32 %v1899, %v1902
        %vm1904 = vweird.f32 %v1723
        %vm1905 = vweird.f32 %v1899
        %vm1906 = vmor %vm1904, %vm1905
        %v1907 = vsel %vm1906, %v1899, %v1903
        %v1908 = vand.u32 2147483647, %v1723
        %vm1909 = vcmp.eq.f32.partialorder %v1908, 8.507059e+37
        %v1910 = vand.u32 %v1723, 2147483648
        %v1911 = vor.u32 1.1754944e-38, %v1910
        %v1912 = vsel %vm1909, %v1911, %v1907
        %v1913 = vmul.f32 1.0, %v1912
        %v1914 = vrcp.pop %v1724
        %v1915 = vmul.f32 %v1724, %v1914
        %v1916 = vsub.f32 1.0, %v1915
        %v1917 = vmul.f32 %v1914, %v1916
        %v1918 = vadd.f32 %v1914, %v1917
        %vm1919 = vweird.f32 %v1724
        %vm1920 = vweird.f32 %v1914
        %vm1921 = vmor %vm1919, %vm1920
        %v1922 = vsel %vm1921, %v1914, %v1918
        %v1923 = vand.u32 2147483647, %v1724
        %vm1924 = vcmp.eq.f32.partialorder %v1923, 8.507059e+37
        %v1925 = vand.u32 %v1724, 2147483648
        %v1926 = vor.u32 1.1754944e-38, %v1925
        %v1927 = vsel %vm1924, %v1926, %v1922
        %v1928 = vmul.f32 1.0, %v1927
        %v1929 = vrcp.pop %v1725
        %v1930 = vmul.f32 %v1725, %v1929
        %v1931 = vsub.f32 1.0, %v1930
        %v1932 = vmul.f32 %v1929, %v1931
        %v1933 = vadd.f32 %v1929, %v1932
        %vm1934 = vweird.f32 %v1725
        %vm1935 = vweird.f32 %v1929
        %vm1936 = vmor %vm1934, %vm1935
        %v1937 = vsel %vm1936, %v1929, %v1933
        %v1938 = vand.u32 2147483647, %v1725
        %vm1939 = vcmp.eq.f32.partialorder %v1938, 8.507059e+37
        %v1940 = vand.u32 %v1725, 2147483648
        %v1941 = vor.u32 1.1754944e-38, %v1940
        %v1942 = vsel %vm1939, %v1941, %v1937
        %v1943 = vmul.f32 1.0, %v1942
        %v1944 = vrcp.pop %v1726
        %v1945 = vmul.f32 %v1726, %v1944
        %v1946 = vsub.f32 1.0, %v1945
        %v1947 = vmul.f32 %v1944, %v1946
        %v1948 = vadd.f32 %v1944, %v1947
        %vm1949 = vweird.f32 %v1726
        %vm1950 = vweird.f32 %v1944
        %vm1951 = vmor %vm1949, %vm1950
        %v1952 = vsel %vm1951, %v1944, %v1948
        %v1953 = vand.u32 2147483647, %v1726
        %vm1954 = vcmp.eq.f32.partialorder %v1953, 8.507059e+37
        %v1955 = vand.u32 %v1726, 2147483648
        %v1956 = vor.u32 1.1754944e-38, %v1955
        %v1957 = vsel %vm1954, %v1956, %v1952
        %v1958 = vmul.f32 1.0, %v1957
        %v1959 = vrcp.pop %v1727
        %v1960 = vmul.f32 %v1727, %v1959
        %v1961 = vsub.f32 1.0, %v1960
        %v1962 = vmul.f32 %v1959, %v1961
        %v1963 = vadd.f32 %v1959, %v1962
        %vm1964 = vweird.f32 %v1727
        %vm1965 = vweird.f32 %v1959
        %vm1966 = vmor %vm1964, %vm1965
        %v1967 = vsel %vm1966, %v1959, %v1963
        %v1968 = vand.u32 2147483647, %v1727
        %vm1969 = vcmp.eq.f32.partialorder %v1968, 8.507059e+37
        %v1970 = vand.u32 %v1727, 2147483648
        %v1971 = vor.u32 1.1754944e-38, %v1970
        %v1972 = vsel %vm1969, %v1971, %v1967
        %v1973 = vmul.f32 1.0, %v1972
        %v1974 = vrcp.pop %v1728
        %v1975 = vmul.f32 %v1728, %v1974
        %v1976 = vsub.f32 1.0, %v1975
        %v1977 = vmul.f32 %v1974, %v1976
        %v1978 = vadd.f32 %v1974, %v1977
        %vm1979 = vweird.f32 %v1728
        %vm1980 = vweird.f32 %v1974
        %vm1981 = vmor %vm1979, %vm1980
        %v1982 = vsel %vm1981, %v1974, %v1978
        %v1983 = vand.u32 2147483647, %v1728
        %vm1984 = vcmp.eq.f32.partialorder %v1983, 8.507059e+37
        %v1985 = vand.u32 %v1728, 2147483648
        %v1986 = vor.u32 1.1754944e-38, %v1985
        %v1987 = vsel %vm1984, %v1986, %v1982
        %v1988 = vmul.f32 1.0, %v1987
        %v1989 = vrcp.pop %v1729
        %v1990 = vmul.f32 %v1729, %v1989
        %v1991 = vsub.f32 1.0, %v1990
        %v1992 = vmul.f32 %v1989, %v1991
        %v1993 = vadd.f32 %v1989, %v1992
        %vm1994 = vweird.f32 %v1729
        %vm1995 = vweird.f32 %v1989
        %vm1996 = vmor %vm1994, %vm1995
        %v1997 = vsel %vm1996, %v1989, %v1993
        %v1998 = vand.u32 2147483647, %v1729
        %vm1999 = vcmp.eq.f32.partialorder %v1998, 8.507059e+37
        %v2000 = vand.u32 %v1729, 2147483648
        %v2001 = vor.u32 1.1754944e-38, %v2000
        %v2002 = vsel %vm1999, %v2001, %v1997
        %v2003 = vmul.f32 1.0, %v2002
        %v2004 = vrcp.pop %v1730
        %v2005 = vmul.f32 %v1730, %v2004
        %v2006 = vsub.f32 1.0, %v2005
        %v2007 = vmul.f32 %v2004, %v2006
        %v2008 = vadd.f32 %v2004, %v2007
        %vm2009 = vweird.f32 %v1730
        %vm2010 = vweird.f32 %v2004
        %vm2011 = vmor %vm2009, %vm2010
        %v2012 = vsel %vm2011, %v2004, %v2008
        %v2013 = vand.u32 2147483647, %v1730
        %vm2014 = vcmp.eq.f32.partialorder %v2013, 8.507059e+37
        %v2015 = vand.u32 %v1730, 2147483648
        %v2016 = vor.u32 1.1754944e-38, %v2015
        %v2017 = vsel %vm2014, %v2016, %v2012
        %v2018 = vmul.f32 1.0, %v2017
        %v2019 = vrcp.pop %v1731
        %v2020 = vmul.f32 %v1731, %v2019
        %v2021 = vsub.f32 1.0, %v2020
        %v2022 = vmul.f32 %v2019, %v2021
        %v2023 = vadd.f32 %v2019, %v2022
        %vm2024 = vweird.f32 %v1731
        %vm2025 = vweird.f32 %v2019
        %vm2026 = vmor %vm2024, %vm2025
        %v2027 = vsel %vm2026, %v2019, %v2023
        %v2028 = vand.u32 2147483647, %v1731
        %vm2029 = vcmp.eq.f32.partialorder %v2028, 8.507059e+37
        %v2030 = vand.u32 %v1731, 2147483648
        %v2031 = vor.u32 1.1754944e-38, %v2030
        %v2032 = vsel %vm2029, %v2031, %v2027
        %v2033 = vmul.f32 1.0, %v2032
        %v2034 = vrcp.pop %v1732
        %v2035 = vmul.f32 %v1732, %v2034
        %v2036 = vsub.f32 1.0, %v2035
        %v2037 = vmul.f32 %v2034, %v2036
        %v2038 = vadd.f32 %v2034, %v2037
        %vm2039 = vweird.f32 %v1732
        %vm2040 = vweird.f32 %v2034
        %vm2041 = vmor %vm2039, %vm2040
        %v2042 = vsel %vm2041, %v2034, %v2038
        %v2043 = vand.u32 2147483647, %v1732
        %vm2044 = vcmp.eq.f32.partialorder %v2043, 8.507059e+37
        %v2045 = vand.u32 %v1732, 2147483648
        %v2046 = vor.u32 1.1754944e-38, %v2045
        %v2047 = vsel %vm2044, %v2046, %v2042
        %v2048 = vmul.f32 1.0, %v2047
        %v2049 = vrcp.pop %v1733
        %v2050 = vmul.f32 %v1733, %v2049
        %v2051 = vsub.f32 1.0, %v2050
        %v2052 = vmul.f32 %v2049, %v2051
        %v2053 = vadd.f32 %v2049, %v2052
        %vm2054 = vweird.f32 %v1733
        %vm2055 = vweird.f32 %v2049
        %vm2056 = vmor %vm2054, %vm2055
        %v2057 = vsel %vm2056, %v2049, %v2053
        %v2058 = vand.u32 2147483647, %v1733
        %vm2059 = vcmp.eq.f32.partialorder %v2058, 8.507059e+37
        %v2060 = vand.u32 %v1733, 2147483648
        %v2061 = vor.u32 1.1754944e-38, %v2060
        %v2062 = vsel %vm2059, %v2061, %v2057
        %v2063 = vmul.f32 1.0, %v2062
        %v2064 = vrcp.pop %v1734
        %v2065 = vmul.f32 %v1734, %v2064
        %v2066 = vsub.f32 1.0, %v2065
        %v2067 = vmul.f32 %v2064, %v2066
        %v2068 = vadd.f32 %v2064, %v2067
        %vm2069 = vweird.f32 %v1734
        %vm2070 = vweird.f32 %v2064
        %vm2071 = vmor %vm2069, %vm2070
        %v2072 = vsel %vm2071, %v2064, %v2068
        %v2073 = vand.u32 2147483647, %v1734
        %vm2074 = vcmp.eq.f32.partialorder %v2073, 8.507059e+37
        %v2075 = vand.u32 %v1734, 2147483648
        %v2076 = vor.u32 1.1754944e-38, %v2075
        %v2077 = vsel %vm2074, %v2076, %v2072
        %v2078 = vmul.f32 1.0, %v2077
        %v2079 = vrcp.pop %v1735
        %v2080 = vmul.f32 %v1735, %v2079
        %v2081 = vsub.f32 1.0, %v2080
        %v2082 = vmul.f32 %v2079, %v2081
        %v2083 = vadd.f32 %v2079, %v2082
        %vm2084 = vweird.f32 %v1735
        %vm2085 = vweird.f32 %v2079
        %vm2086 = vmor %vm2084, %vm2085
        %v2087 = vsel %vm2086, %v2079, %v2083
        %v2088 = vand.u32 2147483647, %v1735
        %vm2089 = vcmp.eq.f32.partialorder %v2088, 8.507059e+37
        %v2090 = vand.u32 %v1735, 2147483648
        %v2091 = vor.u32 1.1754944e-38, %v2090
        %v2092 = vsel %vm2089, %v2091, %v2087
        %v2093 = vmul.f32 1.0, %v2092
        %v2094 = vrcp.pop %v1736
        %v2095 = vmul.f32 %v1736, %v2094
        %v2096 = vsub.f32 1.0, %v2095
        %v2097 = vmul.f32 %v2094, %v2096
        %v2098 = vadd.f32 %v2094, %v2097
        %vm2099 = vweird.f32 %v1736
        %vm2100 = vweird.f32 %v2094
        %vm2101 = vmor %vm2099, %vm2100
        %v2102 = vsel %vm2101, %v2094, %v2098
        %v2103 = vand.u32 2147483647, %v1736
        %vm2104 = vcmp.eq.f32.partialorder %v2103, 8.507059e+37
        %v2105 = vand.u32 %v1736, 2147483648
        %v2106 = vor.u32 1.1754944e-38, %v2105
        %v2107 = vsel %vm2104, %v2106, %v2102
        %v2108 = vmul.f32 1.0, %v2107
        %v2109 = vrcp.pop %v1737
        %v2110 = vmul.f32 %v1737, %v2109
        %v2111 = vsub.f32 1.0, %v2110
        %v2112 = vmul.f32 %v2109, %v2111
        %v2113 = vadd.f32 %v2109, %v2112
        %vm2114 = vweird.f32 %v1737
        %vm2115 = vweird.f32 %v2109
        %vm2116 = vmor %vm2114, %vm2115
        %v2117 = vsel %vm2116, %v2109, %v2113
        %v2118 = vand.u32 2147483647, %v1737
        %vm2119 = vcmp.eq.f32.partialorder %v2118, 8.507059e+37
        %v2120 = vand.u32 %v1737, 2147483648
        %v2121 = vor.u32 1.1754944e-38, %v2120
        %v2122 = vsel %vm2119, %v2121, %v2117
        %v2123 = vmul.f32 1.0, %v2122
        %v2124 = vrcp.pop %v1738
        %v2125 = vmul.f32 %v1738, %v2124
        %v2126 = vsub.f32 1.0, %v2125
        %v2127 = vmul.f32 %v2124, %v2126
        %v2128 = vadd.f32 %v2124, %v2127
        %vm2129 = vweird.f32 %v1738
        %vm2130 = vweird.f32 %v2124
        %vm2131 = vmor %vm2129, %vm2130
        %v2132 = vsel %vm2131, %v2124, %v2128
        %v2133 = vand.u32 2147483647, %v1738
        %vm2134 = vcmp.eq.f32.partialorder %v2133, 8.507059e+37
        %v2135 = vand.u32 %v1738, 2147483648
        %v2136 = vor.u32 1.1754944e-38, %v2135
        %v2137 = vsel %vm2134, %v2136, %v2132
        %v2138 = vmul.f32 1.0, %v2137
        %v2139 = vrcp.pop %v1739
        %v2140 = vmul.f32 %v1739, %v2139
        %v2141 = vsub.f32 1.0, %v2140
        %v2142 = vmul.f32 %v2139, %v2141
        %v2143 = vadd.f32 %v2139, %v2142
        %vm2144 = vweird.f32 %v1739
        %vm2145 = vweird.f32 %v2139
        %vm2146 = vmor %vm2144, %vm2145
        %v2147 = vsel %vm2146, %v2139, %v2143
        %v2148 = vand.u32 2147483647, %v1739
        %vm2149 = vcmp.eq.f32.partialorder %v2148, 8.507059e+37
        %v2150 = vand.u32 %v1739, 2147483648
        %v2151 = vor.u32 1.1754944e-38, %v2150
        %v2152 = vsel %vm2149, %v2151, %v2147
        %v2153 = vmul.f32 1.0, %v2152
        %v2154 = vrcp.pop %v1740
        %v2155 = vmul.f32 %v1740, %v2154
        %v2156 = vsub.f32 1.0, %v2155
        %v2157 = vmul.f32 %v2154, %v2156
        %v2158 = vadd.f32 %v2154, %v2157
        %vm2159 = vweird.f32 %v1740
        %vm2160 = vweird.f32 %v2154
        %vm2161 = vmor %vm2159, %vm2160
        %v2162 = vsel %vm2161, %v2154, %v2158
        %v2163 = vand.u32 2147483647, %v1740
        %vm2164 = vcmp.eq.f32.partialorder %v2163, 8.507059e+37
        %v2165 = vand.u32 %v1740, 2147483648
        %v2166 = vor.u32 1.1754944e-38, %v2165
        %v2167 = vsel %vm2164, %v2166, %v2162
        %v2168 = vmul.f32 1.0, %v2167
        %v2169 = vrcp.pop %v1741
        %v2170 = vmul.f32 %v1741, %v2169
        %v2171 = vsub.f32 1.0, %v2170
        %v2172 = vmul.f32 %v2169, %v2171
        %v2173 = vadd.f32 %v2169, %v2172
        %vm2174 = vweird.f32 %v1741
        %vm2175 = vweird.f32 %v2169
        %vm2176 = vmor %vm2174, %vm2175
        %v2177 = vsel %vm2176, %v2169, %v2173
        %v2178 = vand.u32 2147483647, %v1741
        %vm2179 = vcmp.eq.f32.partialorder %v2178, 8.507059e+37
        %v2180 = vand.u32 %v1741, 2147483648
        %v2181 = vor.u32 1.1754944e-38, %v2180
        %v2182 = vsel %vm2179, %v2181, %v2177
        %v2183 = vmul.f32 1.0, %v2182
        %v2184 = vrcp.pop %v1742
        %v2185 = vmul.f32 %v1742, %v2184
        %v2186 = vsub.f32 1.0, %v2185
        %v2187 = vmul.f32 %v2184, %v2186
        %v2188 = vadd.f32 %v2184, %v2187
        %vm2189 = vweird.f32 %v1742
        %vm2190 = vweird.f32 %v2184
        %vm2191 = vmor %vm2189, %vm2190
        %v2192 = vsel %vm2191, %v2184, %v2188
        %v2193 = vand.u32 2147483647, %v1742
        %vm2194 = vcmp.eq.f32.partialorder %v2193, 8.507059e+37
        %v2195 = vand.u32 %v1742, 2147483648
        %v2196 = vor.u32 1.1754944e-38, %v2195
        %v2197 = vsel %vm2194, %v2196, %v2192
        %v2198 = vmul.f32 1.0, %v2197
        %v2199 = vrcp.pop %v1743
        %v2200 = vmul.f32 %v1743, %v2199
        %v2201 = vsub.f32 1.0, %v2200
        %v2202 = vmul.f32 %v2199, %v2201
        %v2203 = vadd.f32 %v2199, %v2202
        %vm2204 = vweird.f32 %v1743
        %vm2205 = vweird.f32 %v2199
        %vm2206 = vmor %vm2204, %vm2205
        %v2207 = vsel %vm2206, %v2199, %v2203
        %v2208 = vand.u32 2147483647, %v1743
        %vm2209 = vcmp.eq.f32.partialorder %v2208, 8.507059e+37
        %v2210 = vand.u32 %v1743, 2147483648
        %v2211 = vor.u32 1.1754944e-38, %v2210
        %v2212 = vsel %vm2209, %v2211, %v2207
        %v2213 = vmul.f32 1.0, %v2212
        %v2214 = vrcp.pop %v1744
        %v2215 = vmul.f32 %v1744, %v2214
        %v2216 = vsub.f32 1.0, %v2215
        %v2217 = vmul.f32 %v2214, %v2216
        %v2218 = vadd.f32 %v2214, %v2217
        %vm2219 = vweird.f32 %v1744
        %vm2220 = vweird.f32 %v2214
        %vm2221 = vmor %vm2219, %vm2220
        %v2222 = vsel %vm2221, %v2214, %v2218
        %v2223 = vand.u32 2147483647, %v1744
        %vm2224 = vcmp.eq.f32.partialorder %v2223, 8.507059e+37
        %v2225 = vand.u32 %v1744, 2147483648
        %v2226 = vor.u32 1.1754944e-38, %v2225
        %v2227 = vsel %vm2224, %v2226, %v2222
        %v2228 = vmul.f32 1.0, %v2227
        %v2229 = vrcp.pop %v1745
        %v2230 = vmul.f32 %v1745, %v2229
        %v2231 = vsub.f32 1.0, %v2230
        %v2232 = vmul.f32 %v2229, %v2231
        %v2233 = vadd.f32 %v2229, %v2232
        %vm2234 = vweird.f32 %v1745
        %vm2235 = vweird.f32 %v2229
        %vm2236 = vmor %vm2234, %vm2235
        %v2237 = vsel %vm2236, %v2229, %v2233
        %v2238 = vand.u32 2147483647, %v1745
        %vm2239 = vcmp.eq.f32.partialorder %v2238, 8.507059e+37
        %v2240 = vand.u32 %v1745, 2147483648
        %v2241 = vor.u32 1.1754944e-38, %v2240
        %v2242 = vsel %vm2239, %v2241, %v2237
        %v2243 = vmul.f32 1.0, %v2242
        %v2244 = vrcp.pop %v1746
        %v2245 = vmul.f32 %v1746, %v2244
        %v2246 = vsub.f32 1.0, %v2245
        %v2247 = vmul.f32 %v2244, %v2246
        %v2248 = vadd.f32 %v2244, %v2247
        %vm2249 = vweird.f32 %v1746
        %vm2250 = vweird.f32 %v2244
        %vm2251 = vmor %vm2249, %vm2250
        %v2252 = vsel %vm2251, %v2244, %v2248
        %v2253 = vand.u32 2147483647, %v1746
        %vm2254 = vcmp.eq.f32.partialorder %v2253, 8.507059e+37
        %v2255 = vand.u32 %v1746, 2147483648
        %v2256 = vor.u32 1.1754944e-38, %v2255
        %v2257 = vsel %vm2254, %v2256, %v2252
        %v2258 = vmul.f32 1.0, %v2257
        %v2259 = vrcp.pop %v1747
        %v2260 = vmul.f32 %v1747, %v2259
        %v2261 = vsub.f32 1.0, %v2260
        %v2262 = vmul.f32 %v2259, %v2261
        %v2263 = vadd.f32 %v2259, %v2262
        %vm2264 = vweird.f32 %v1747
        %vm2265 = vweird.f32 %v2259
        %vm2266 = vmor %vm2264, %vm2265
        %v2267 = vsel %vm2266, %v2259, %v2263
        %v2268 = vand.u32 2147483647, %v1747
        %vm2269 = vcmp.eq.f32.partialorder %v2268, 8.507059e+37
        %v2270 = vand.u32 %v1747, 2147483648
        %v2271 = vor.u32 1.1754944e-38, %v2270
        %v2272 = vsel %vm2269, %v2271, %v2267
        %v2273 = vmul.f32 1.0, %v2272
        %v2274 = vrcp.pop %v1748
        %v2275 = vmul.f32 %v1748, %v2274
        %v2276 = vsub.f32 1.0, %v2275
        %v2277 = vmul.f32 %v2274, %v2276
        %v2278 = vadd.f32 %v2274, %v2277
        %vm2279 = vweird.f32 %v1748
        %vm2280 = vweird.f32 %v2274
        %vm2281 = vmor %vm2279, %vm2280
        %v2282 = vsel %vm2281, %v2274, %v2278
        %v2283 = vand.u32 2147483647, %v1748
        %vm2284 = vcmp.eq.f32.partialorder %v2283, 8.507059e+37
        %v2285 = vand.u32 %v1748, 2147483648
        %v2286 = vor.u32 1.1754944e-38, %v2285
        %v2287 = vsel %vm2284, %v2286, %v2282
        %v2288 = vmul.f32 1.0, %v2287
        %v2289 = vrcp.pop %v1749
        %v2290 = vmul.f32 %v1749, %v2289
        %v2291 = vsub.f32 1.0, %v2290
        %v2292 = vmul.f32 %v2289, %v2291
        %v2293 = vadd.f32 %v2289, %v2292
        %vm2294 = vweird.f32 %v1749
        %vm2295 = vweird.f32 %v2289
        %vm2296 = vmor %vm2294, %vm2295
        %v2297 = vsel %vm2296, %v2289, %v2293
        %v2298 = vand.u32 2147483647, %v1749
        %vm2299 = vcmp.eq.f32.partialorder %v2298, 8.507059e+37
        %v2300 = vand.u32 %v1749, 2147483648
        %v2301 = vor.u32 1.1754944e-38, %v2300
        %v2302 = vsel %vm2299, %v2301, %v2297
        %v2303 = vmul.f32 1.0, %v2302
        %v2304 = vrcp.pop %v1750
        %v2305 = vmul.f32 %v1750, %v2304
        %v2306 = vsub.f32 1.0, %v2305
        %v2307 = vmul.f32 %v2304, %v2306
        %v2308 = vadd.f32 %v2304, %v2307
        %vm2309 = vweird.f32 %v1750
        %vm2310 = vweird.f32 %v2304
        %vm2311 = vmor %vm2309, %vm2310
        %v2312 = vsel %vm2311, %v2304, %v2308
        %v2313 = vand.u32 2147483647, %v1750
        %vm2314 = vcmp.eq.f32.partialorder %v2313, 8.507059e+37
        %v2315 = vand.u32 %v1750, 2147483648
        %v2316 = vor.u32 1.1754944e-38, %v2315
        %v2317 = vsel %vm2314, %v2316, %v2312
        %v2318 = vmul.f32 1.0, %v2317
        %v2319 = vrcp.pop %v1751
        %v2320 = vmul.f32 %v1751, %v2319
        %v2321 = vsub.f32 1.0, %v2320
        %v2322 = vmul.f32 %v2319, %v2321
        %v2323 = vadd.f32 %v2319, %v2322
        %vm2324 = vweird.f32 %v1751
        %vm2325 = vweird.f32 %v2319
        %vm2326 = vmor %vm2324, %vm2325
        %v2327 = vsel %vm2326, %v2319, %v2323
        %v2328 = vand.u32 2147483647, %v1751
        %vm2329 = vcmp.eq.f32.partialorder %v2328, 8.507059e+37
        %v2330 = vand.u32 %v1751, 2147483648
        %v2331 = vor.u32 1.1754944e-38, %v2330
        %v2332 = vsel %vm2329, %v2331, %v2327
        %v2333 = vmul.f32 1.0, %v2332
        %v2334 = vrcp.pop %v1752
        %v2335 = vmul.f32 %v1752, %v2334
        %v2336 = vsub.f32 1.0, %v2335
        %v2337 = vmul.f32 %v2334, %v2336
        %v2338 = vadd.f32 %v2334, %v2337
        %vm2339 = vweird.f32 %v1752
        %vm2340 = vweird.f32 %v2334
        %vm2341 = vmor %vm2339, %vm2340
        %v2342 = vsel %vm2341, %v2334, %v2338
        %v2343 = vand.u32 2147483647, %v1752
        %vm2344 = vcmp.eq.f32.partialorder %v2343, 8.507059e+37
        %v2345 = vand.u32 %v1752, 2147483648
        %v2346 = vor.u32 1.1754944e-38, %v2345
        %v2347 = vsel %vm2344, %v2346, %v2342
        %v2348 = vmul.f32 1.0, %v2347
        %v2349 = vrcp.pop %v1753
        %v2350 = vmul.f32 %v1753, %v2349
        %v2351 = vsub.f32 1.0, %v2350
        %v2352 = vmul.f32 %v2349, %v2351
        %v2353 = vadd.f32 %v2349, %v2352
        %vm2354 = vweird.f32 %v1753
        %vm2355 = vweird.f32 %v2349
        %vm2356 = vmor %vm2354, %vm2355
        %v2357 = vsel %vm2356, %v2349, %v2353
        %v2358 = vand.u32 2147483647, %v1753
        %vm2359 = vcmp.eq.f32.partialorder %v2358, 8.507059e+37
        %v2360 = vand.u32 %v1753, 2147483648
        %v2361 = vor.u32 1.1754944e-38, %v2360
        %v2362 = vsel %vm2359, %v2361, %v2357
        %v2363 = vmul.f32 1.0, %v2362
        %v2364 = vrcp.pop %v1754
        %v2365 = vmul.f32 %v1754, %v2364
        %v2366 = vsub.f32 1.0, %v2365
        %v2367 = vmul.f32 %v2364, %v2366
        %v2368 = vadd.f32 %v2364, %v2367
        %vm2369 = vweird.f32 %v1754
        %vm2370 = vweird.f32 %v2364
        %vm2371 = vmor %vm2369, %vm2370
        %v2372 = vsel %vm2371, %v2364, %v2368
        %v2373 = vand.u32 2147483647, %v1754
        %vm2374 = vcmp.eq.f32.partialorder %v2373, 8.507059e+37
        %v2375 = vand.u32 %v1754, 2147483648
        %v2376 = vor.u32 1.1754944e-38, %v2375
        %v2377 = vsel %vm2374, %v2376, %v2372
        %v2378 = vmul.f32 1.0, %v2377
        %v2379 = vrcp.pop %v1755
        %v2380 = vmul.f32 %v1755, %v2379
        %v2381 = vsub.f32 1.0, %v2380
        %v2382 = vmul.f32 %v2379, %v2381
        %v2383 = vadd.f32 %v2379, %v2382
        %vm2384 = vweird.f32 %v1755
        %vm2385 = vweird.f32 %v2379
        %vm2386 = vmor %vm2384, %vm2385
        %v2387 = vsel %vm2386, %v2379, %v2383
        %v2388 = vand.u32 2147483647, %v1755
        %vm2389 = vcmp.eq.f32.partialorder %v2388, 8.507059e+37
        %v2390 = vand.u32 %v1755, 2147483648
        %v2391 = vor.u32 1.1754944e-38, %v2390
        %v2392 = vsel %vm2389, %v2391, %v2387
        %v2393 = vmul.f32 1.0, %v2392
        %v2394 = vrcp.pop %v1756
        %v2395 = vmul.f32 %v1756, %v2394
        %v2396 = vsub.f32 1.0, %v2395
        %v2397 = vmul.f32 %v2394, %v2396
        %v2398 = vadd.f32 %v2394, %v2397
        %vm2399 = vweird.f32 %v1756
        %vm2400 = vweird.f32 %v2394
        %vm2401 = vmor %vm2399, %vm2400
        %v2402 = vsel %vm2401, %v2394, %v2398
        %v2403 = vand.u32 2147483647, %v1756
        %vm2404 = vcmp.eq.f32.partialorder %v2403, 8.507059e+37
        %v2405 = vand.u32 %v1756, 2147483648
        %v2406 = vor.u32 1.1754944e-38, %v2405
        %v2407 = vsel %vm2404, %v2406, %v2402
        %v2408 = vmul.f32 1.0, %v2407
        %v2409 = vrcp.pop %v1757
        %v2410 = vmul.f32 %v1757, %v2409
        %v2411 = vsub.f32 1.0, %v2410
        %v2412 = vmul.f32 %v2409, %v2411
        %v2413 = vadd.f32 %v2409, %v2412
        %vm2414 = vweird.f32 %v1757
        %vm2415 = vweird.f32 %v2409
        %vm2416 = vmor %vm2414, %vm2415
        %v2417 = vsel %vm2416, %v2409, %v2413
        %v2418 = vand.u32 2147483647, %v1757
        %vm2419 = vcmp.eq.f32.partialorder %v2418, 8.507059e+37
        %v2420 = vand.u32 %v1757, 2147483648
        %v2421 = vor.u32 1.1754944e-38, %v2420
        %v2422 = vsel %vm2419, %v2421, %v2417
        %v2423 = vmul.f32 1.0, %v2422
        %v2424 = vrcp.pop %v1758
        %v2425 = vmul.f32 %v1758, %v2424
        %v2426 = vsub.f32 1.0, %v2425
        %v2427 = vmul.f32 %v2424, %v2426
        %v2428 = vadd.f32 %v2424, %v2427
        %vm2429 = vweird.f32 %v1758
        %vm2430 = vweird.f32 %v2424
        %vm2431 = vmor %vm2429, %vm2430
        %v2432 = vsel %vm2431, %v2424, %v2428
        %v2433 = vand.u32 2147483647, %v1758
        %vm2434 = vcmp.eq.f32.partialorder %v2433, 8.507059e+37
        %v2435 = vand.u32 %v1758, 2147483648
        %v2436 = vor.u32 1.1754944e-38, %v2435
        %v2437 = vsel %vm2434, %v2436, %v2432
        %v2438 = vmul.f32 1.0, %v2437
        %v2439 = vrcp.pop %v1759
        %v2440 = vmul.f32 %v1759, %v2439
        %v2441 = vsub.f32 1.0, %v2440
        %v2442 = vmul.f32 %v2439, %v2441
        %v2443 = vadd.f32 %v2439, %v2442
        %vm2444 = vweird.f32 %v1759
        %vm2445 = vweird.f32 %v2439
        %vm2446 = vmor %vm2444, %vm2445
        %v2447 = vsel %vm2446, %v2439, %v2443
        %v2448 = vand.u32 2147483647, %v1759
        %vm2449 = vcmp.eq.f32.partialorder %v2448, 8.507059e+37
        %v2450 = vand.u32 %v1759, 2147483648
        %v2451 = vor.u32 1.1754944e-38, %v2450
        %v2452 = vsel %vm2449, %v2451, %v2447
        %v2453 = vmul.f32 1.0, %v2452
        %v2454 = vrcp.pop %v1760
        %v2455 = vmul.f32 %v1760, %v2454
        %v2456 = vsub.f32 1.0, %v2455
        %v2457 = vmul.f32 %v2454, %v2456
        %v2458 = vadd.f32 %v2454, %v2457
        %vm2459 = vweird.f32 %v1760
        %vm2460 = vweird.f32 %v2454
        %vm2461 = vmor %vm2459, %vm2460
        %v2462 = vsel %vm2461, %v2454, %v2458
        %v2463 = vand.u32 2147483647, %v1760
        %vm2464 = vcmp.eq.f32.partialorder %v2463, 8.507059e+37
        %v2465 = vand.u32 %v1760, 2147483648
        %v2466 = vor.u32 1.1754944e-38, %v2465
        %v2467 = vsel %vm2464, %v2466, %v2462
        %v2468 = vmul.f32 1.0, %v2467
        %v2469 = vrcp.pop %v1761
        %v2470 = vmul.f32 %v1761, %v2469
        %v2471 = vsub.f32 1.0, %v2470
        %v2472 = vmul.f32 %v2469, %v2471
        %v2473 = vadd.f32 %v2469, %v2472
        %vm2474 = vweird.f32 %v1761
        %vm2475 = vweird.f32 %v2469
        %vm2476 = vmor %vm2474, %vm2475
        %v2477 = vsel %vm2476, %v2469, %v2473
        %v2478 = vand.u32 2147483647, %v1761
        %vm2479 = vcmp.eq.f32.partialorder %v2478, 8.507059e+37
        %v2480 = vand.u32 %v1761, 2147483648
        %v2481 = vor.u32 1.1754944e-38, %v2480
        %v2482 = vsel %vm2479, %v2481, %v2477
        %v2483 = vmul.f32 1.0, %v2482
        %v2484 = vrcp.pop %v1762
        %v2485 = vmul.f32 %v1762, %v2484
        %v2486 = vsub.f32 1.0, %v2485
        %v2487 = vmul.f32 %v2484, %v2486
        %v2488 = vadd.f32 %v2484, %v2487
        %vm2489 = vweird.f32 %v1762
        %vm2490 = vweird.f32 %v2484
        %vm2491 = vmor %vm2489, %vm2490
        %v2492 = vsel %vm2491, %v2484, %v2488
        %v2493 = vand.u32 2147483647, %v1762
        %vm2494 = vcmp.eq.f32.partialorder %v2493, 8.507059e+37
        %v2495 = vand.u32 %v1762, 2147483648
        %v2496 = vor.u32 1.1754944e-38, %v2495
        %v2497 = vsel %vm2494, %v2496, %v2492
        %v2498 = vmul.f32 1.0, %v2497
        %v2499 = vrcp.pop %v1763
        %v2500 = vmul.f32 %v1763, %v2499
        %v2501 = vsub.f32 1.0, %v2500
        %v2502 = vmul.f32 %v2499, %v2501
        %v2503 = vadd.f32 %v2499, %v2502
        %vm2504 = vweird.f32 %v1763
        %vm2505 = vweird.f32 %v2499
        %vm2506 = vmor %vm2504, %vm2505
        %v2507 = vsel %vm2506, %v2499, %v2503
        %v2508 = vand.u32 2147483647, %v1763
        %vm2509 = vcmp.eq.f32.partialorder %v2508, 8.507059e+37
        %v2510 = vand.u32 %v1763, 2147483648
        %v2511 = vor.u32 1.1754944e-38, %v2510
        %v2512 = vsel %vm2509, %v2511, %v2507
        %v2513 = vmul.f32 1.0, %v2512
        %v2514 = vrcp.pop %v1764
        %v2515 = vmul.f32 %v1764, %v2514
        %v2516 = vsub.f32 1.0, %v2515
        %v2517 = vmul.f32 %v2514, %v2516
        %v2518 = vadd.f32 %v2514, %v2517
        %vm2519 = vweird.f32 %v1764
        %vm2520 = vweird.f32 %v2514
        %vm2521 = vmor %vm2519, %vm2520
        %v2522 = vsel %vm2521, %v2514, %v2518
        %v2523 = vand.u32 2147483647, %v1764
        %vm2524 = vcmp.eq.f32.partialorder %v2523, 8.507059e+37
        %v2525 = vand.u32 %v1764, 2147483648
        %v2526 = vor.u32 1.1754944e-38, %v2525
        %v2527 = vsel %vm2524, %v2526, %v2522
        %v2528 = vmul.f32 1.0, %v2527
        %v2529 = vrcp.pop %v1765
        %v2530 = vmul.f32 %v1765, %v2529
        %v2531 = vsub.f32 1.0, %v2530
        %v2532 = vmul.f32 %v2529, %v2531
        %v2533 = vadd.f32 %v2529, %v2532
        %vm2534 = vweird.f32 %v1765
        %vm2535 = vweird.f32 %v2529
        %vm2536 = vmor %vm2534, %vm2535
        %v2537 = vsel %vm2536, %v2529, %v2533
        %v2538 = vand.u32 2147483647, %v1765
        %vm2539 = vcmp.eq.f32.partialorder %v2538, 8.507059e+37
        %v2540 = vand.u32 %v1765, 2147483648
        %v2541 = vor.u32 1.1754944e-38, %v2540
        %v2542 = vsel %vm2539, %v2541, %v2537
        %v2543 = vmul.f32 1.0, %v2542
        %v2544 = vrcp.pop %v1766
        %v2545 = vmul.f32 %v1766, %v2544
        %v2546 = vsub.f32 1.0, %v2545
        %v2547 = vmul.f32 %v2544, %v2546
        %v2548 = vadd.f32 %v2544, %v2547
        %vm2549 = vweird.f32 %v1766
        %vm2550 = vweird.f32 %v2544
        %vm2551 = vmor %vm2549, %vm2550
        %v2552 = vsel %vm2551, %v2544, %v2548
        %v2553 = vand.u32 2147483647, %v1766
        %vm2554 = vcmp.eq.f32.partialorder %v2553, 8.507059e+37
        %v2555 = vand.u32 %v1766, 2147483648
        %v2556 = vor.u32 1.1754944e-38, %v2555
        %v2557 = vsel %vm2554, %v2556, %v2552
        %v2558 = vmul.f32 1.0, %v2557
        %v2559 = vrcp.pop %v1767
        %v2560 = vmul.f32 %v1767, %v2559
        %v2561 = vsub.f32 1.0, %v2560
        %v2562 = vmul.f32 %v2559, %v2561
        %v2563 = vadd.f32 %v2559, %v2562
        %vm2564 = vweird.f32 %v1767
        %vm2565 = vweird.f32 %v2559
        %vm2566 = vmor %vm2564, %vm2565
        %v2567 = vsel %vm2566, %v2559, %v2563
        %v2568 = vand.u32 2147483647, %v1767
        %vm2569 = vcmp.eq.f32.partialorder %v2568, 8.507059e+37
        %v2570 = vand.u32 %v1767, 2147483648
        %v2571 = vor.u32 1.1754944e-38, %v2570
        %v2572 = vsel %vm2569, %v2571, %v2567
        %v2573 = vmul.f32 1.0, %v2572
        %v2574 = vrcp.pop %v1768
        %v2575 = vmul.f32 %v1768, %v2574
        %v2576 = vsub.f32 1.0, %v2575
        %v2577 = vmul.f32 %v2574, %v2576
        %v2578 = vadd.f32 %v2574, %v2577
        %vm2579 = vweird.f32 %v1768
        %vm2580 = vweird.f32 %v2574
        %vm2581 = vmor %vm2579, %vm2580
        %v2582 = vsel %vm2581, %v2574, %v2578
        %v2583 = vand.u32 2147483647, %v1768
        %vm2584 = vcmp.eq.f32.partialorder %v2583, 8.507059e+37
        %v2585 = vand.u32 %v1768, 2147483648
        %v2586 = vor.u32 1.1754944e-38, %v2585
        %v2587 = vsel %vm2584, %v2586, %v2582
        %v2588 = vmul.f32 1.0, %v2587
        %v2589 = vrcp.pop %v1769
        %v2590 = vmul.f32 %v1769, %v2589
        %v2591 = vsub.f32 1.0, %v2590
        %v2592 = vmul.f32 %v2589, %v2591
        %v2593 = vadd.f32 %v2589, %v2592
        %vm2594 = vweird.f32 %v1769
        %vm2595 = vweird.f32 %v2589
        %vm2596 = vmor %vm2594, %vm2595
        %v2597 = vsel %vm2596, %v2589, %v2593
        %v2598 = vand.u32 2147483647, %v1769
        %vm2599 = vcmp.eq.f32.partialorder %v2598, 8.507059e+37
        %v2600 = vand.u32 %v1769, 2147483648
        %v2601 = vor.u32 1.1754944e-38, %v2600
        %v2602 = vsel %vm2599, %v2601, %v2597
        %v2603 = vmul.f32 1.0, %v2602
        %v2604 = vrcp.pop %v1770
        %v2605 = vmul.f32 %v1770, %v2604
        %v2606 = vsub.f32 1.0, %v2605
        %v2607 = vmul.f32 %v2604, %v2606
        %v2608 = vadd.f32 %v2604, %v2607
        %vm2609 = vweird.f32 %v1770
        %vm2610 = vweird.f32 %v2604
        %vm2611 = vmor %vm2609, %vm2610
        %v2612 = vsel %vm2611, %v2604, %v2608
        %v2613 = vand.u32 2147483647, %v1770
        %vm2614 = vcmp.eq.f32.partialorder %v2613, 8.507059e+37
        %v2615 = vand.u32 %v1770, 2147483648
        %v2616 = vor.u32 1.1754944e-38, %v2615
        %v2617 = vsel %vm2614, %v2616, %v2612
        %v2618 = vmul.f32 1.0, %v2617
        %v2619 = vrcp.pop %v1771
        %v2620 = vmul.f32 %v1771, %v2619
        %v2621 = vsub.f32 1.0, %v2620
        %v2622 = vmul.f32 %v2619, %v2621
        %v2623 = vadd.f32 %v2619, %v2622
        %vm2624 = vweird.f32 %v1771
        %vm2625 = vweird.f32 %v2619
        %vm2626 = vmor %vm2624, %vm2625
        %v2627 = vsel %vm2626, %v2619, %v2623
        %v2628 = vand.u32 2147483647, %v1771
        %vm2629 = vcmp.eq.f32.partialorder %v2628, 8.507059e+37
        %v2630 = vand.u32 %v1771, 2147483648
        %v2631 = vor.u32 1.1754944e-38, %v2630
        %v2632 = vsel %vm2629, %v2631, %v2627
        %v2633 = vmul.f32 1.0, %v2632
        %v2634 = vrcp.pop %v1772
        %v2635 = vmul.f32 %v1772, %v2634
        %v2636 = vsub.f32 1.0, %v2635
        %v2637 = vmul.f32 %v2634, %v2636
        %v2638 = vadd.f32 %v2634, %v2637
        %vm2639 = vweird.f32 %v1772
        %vm2640 = vweird.f32 %v2634
        %vm2641 = vmor %vm2639, %vm2640
        %v2642 = vsel %vm2641, %v2634, %v2638
        %v2643 = vand.u32 2147483647, %v1772
        %vm2644 = vcmp.eq.f32.partialorder %v2643, 8.507059e+37
        %v2645 = vand.u32 %v1772, 2147483648
        %v2646 = vor.u32 1.1754944e-38, %v2645
        %v2647 = vsel %vm2644, %v2646, %v2642
        %v2648 = vmul.f32 1.0, %v2647
        %v2649 = vrcp.pop %v1773
        %v2650 = vmul.f32 %v1773, %v2649
        %v2651 = vsub.f32 1.0, %v2650
        %v2652 = vmul.f32 %v2649, %v2651
        %v2653 = vadd.f32 %v2649, %v2652
        %vm2654 = vweird.f32 %v1773
        %vm2655 = vweird.f32 %v2649
        %vm2656 = vmor %vm2654, %vm2655
        %v2657 = vsel %vm2656, %v2649, %v2653
        %v2658 = vand.u32 2147483647, %v1773
        %vm2659 = vcmp.eq.f32.partialorder %v2658, 8.507059e+37
        %v2660 = vand.u32 %v1773, 2147483648
        %v2661 = vor.u32 1.1754944e-38, %v2660
        %v2662 = vsel %vm2659, %v2661, %v2657
        %v2663 = vmul.f32 1.0, %v2662
        %v2664 = vrcp.pop %v1774
        %v2665 = vmul.f32 %v1774, %v2664
        %v2666 = vsub.f32 1.0, %v2665
        %v2667 = vmul.f32 %v2664, %v2666
        %v2668 = vadd.f32 %v2664, %v2667
        %vm2669 = vweird.f32 %v1774
        %vm2670 = vweird.f32 %v2664
        %vm2671 = vmor %vm2669, %vm2670
        %v2672 = vsel %vm2671, %v2664, %v2668
        %v2673 = vand.u32 2147483647, %v1774
        %vm2674 = vcmp.eq.f32.partialorder %v2673, 8.507059e+37
        %v2675 = vand.u32 %v1774, 2147483648
        %v2676 = vor.u32 1.1754944e-38, %v2675
        %v2677 = vsel %vm2674, %v2676, %v2672
        %v2678 = vmul.f32 1.0, %v2677
        %v2679 = vrcp.pop %v1775
        %v2680 = vmul.f32 %v1775, %v2679
        %v2681 = vsub.f32 1.0, %v2680
        %v2682 = vmul.f32 %v2679, %v2681
        %v2683 = vadd.f32 %v2679, %v2682
        %vm2684 = vweird.f32 %v1775
        %vm2685 = vweird.f32 %v2679
        %vm2686 = vmor %vm2684, %vm2685
        %v2687 = vsel %vm2686, %v2679, %v2683
        %v2688 = vand.u32 2147483647, %v1775
        %vm2689 = vcmp.eq.f32.partialorder %v2688, 8.507059e+37
        %v2690 = vand.u32 %v1775, 2147483648
        %v2691 = vor.u32 1.1754944e-38, %v2690
        %v2692 = vsel %vm2689, %v2691, %v2687
        %v2693 = vmul.f32 1.0, %v2692
        %v2694 = vrcp.pop %v1776
        %v2695 = vmul.f32 %v1776, %v2694
        %v2696 = vsub.f32 1.0, %v2695
        %v2697 = vmul.f32 %v2694, %v2696
        %v2698 = vadd.f32 %v2694, %v2697
        %vm2699 = vweird.f32 %v1776
        %vm2700 = vweird.f32 %v2694
        %vm2701 = vmor %vm2699, %vm2700
        %v2702 = vsel %vm2701, %v2694, %v2698
        %v2703 = vand.u32 2147483647, %v1776
        %vm2704 = vcmp.eq.f32.partialorder %v2703, 8.507059e+37
        %v2705 = vand.u32 %v1776, 2147483648
        %v2706 = vor.u32 1.1754944e-38, %v2705
        %v2707 = vsel %vm2704, %v2706, %v2702
        %v2708 = vmul.f32 1.0, %v2707
        %v2709 = vrcp.pop %v1777
        %v2710 = vmul.f32 %v1777, %v2709
        %v2711 = vsub.f32 1.0, %v2710
        %v2712 = vmul.f32 %v2709, %v2711
        %v2713 = vadd.f32 %v2709, %v2712
        %vm2714 = vweird.f32 %v1777
        %vm2715 = vweird.f32 %v2709
        %vm2716 = vmor %vm2714, %vm2715
        %v2717 = vsel %vm2716, %v2709, %v2713
        %v2718 = vand.u32 2147483647, %v1777
        %vm2719 = vcmp.eq.f32.partialorder %v2718, 8.507059e+37
        %v2720 = vand.u32 %v1777, 2147483648
        %v2721 = vor.u32 1.1754944e-38, %v2720
        %v2722 = vsel %vm2719, %v2721, %v2717
        %v2723 = vmul.f32 1.0, %v2722
        %v2724 = vrcp.pop %v1778
        %v2725 = vmul.f32 %v1778, %v2724
        %v2726 = vsub.f32 1.0, %v2725
        %v2727 = vmul.f32 %v2724, %v2726
        %v2728 = vadd.f32 %v2724, %v2727
        %vm2729 = vweird.f32 %v1778
        %vm2730 = vweird.f32 %v2724
        %vm2731 = vmor %vm2729, %vm2730
        %v2732 = vsel %vm2731, %v2724, %v2728
        %v2733 = vand.u32 2147483647, %v1778
        %vm2734 = vcmp.eq.f32.partialorder %v2733, 8.507059e+37
        %v2735 = vand.u32 %v1778, 2147483648
        %v2736 = vor.u32 1.1754944e-38, %v2735
        %v2737 = vsel %vm2734, %v2736, %v2732
        %v2738 = vmul.f32 1.0, %v2737
        %v2739 = vunpack.c.l.bf16 %v225
        %v2740 = vunpack.c.h.bf16 %v225
        %v2741 = vunpack.c.l.bf16 %v226
        %v2742 = vunpack.c.h.bf16 %v226
        %v2743 = vunpack.c.l.bf16 %v227
        %v2744 = vunpack.c.h.bf16 %v227
        %v2745 = vunpack.c.l.bf16 %v228
        %v2746 = vunpack.c.h.bf16 %v228
        %v2747 = vunpack.c.l.bf16 %v229
        %v2748 = vunpack.c.h.bf16 %v229
        %v2749 = vunpack.c.l.bf16 %v230
        %v2750 = vunpack.c.h.bf16 %v230
        %v2751 = vunpack.c.l.bf16 %v231
        %v2752 = vunpack.c.h.bf16 %v231
        %v2753 = vunpack.c.l.bf16 %v232
        %v2754 = vunpack.c.h.bf16 %v232
        %v2755 = vunpack.c.l.bf16 %v233
        %v2756 = vunpack.c.h.bf16 %v233
        %v2757 = vunpack.c.l.bf16 %v234
        %v2758 = vunpack.c.h.bf16 %v234
        %v2759 = vunpack.c.l.bf16 %v235
        %v2760 = vunpack.c.h.bf16 %v235
        %v2761 = vunpack.c.l.bf16 %v236
        %v2762 = vunpack.c.h.bf16 %v236
        %v2763 = vunpack.c.l.bf16 %v237
        %v2764 = vunpack.c.h.bf16 %v237
        %v2765 = vunpack.c.l.bf16 %v238
        %v2766 = vunpack.c.h.bf16 %v238
        %v2767 = vunpack.c.l.bf16 %v239
        %v2768 = vunpack.c.h.bf16 %v239
        %v2769 = vunpack.c.l.bf16 %v240
        %v2770 = vunpack.c.h.bf16 %v240
        %v2771 = vunpack.c.l.bf16 %v241
        %v2772 = vunpack.c.h.bf16 %v241
        %v2773 = vunpack.c.l.bf16 %v242
        %v2774 = vunpack.c.h.bf16 %v242
        %v2775 = vunpack.c.l.bf16 %v243
        %v2776 = vunpack.c.h.bf16 %v243
        %v2777 = vunpack.c.l.bf16 %v244
        %v2778 = vunpack.c.h.bf16 %v244
        %v2779 = vunpack.c.l.bf16 %v245
        %v2780 = vunpack.c.h.bf16 %v245
        %v2781 = vunpack.c.l.bf16 %v246
        %v2782 = vunpack.c.h.bf16 %v246
        %v2783 = vunpack.c.l.bf16 %v247
        %v2784 = vunpack.c.h.bf16 %v247
        %v2785 = vunpack.c.l.bf16 %v248
        %v2786 = vunpack.c.h.bf16 %v248
        %v2787 = vunpack.c.l.bf16 %v249
        %v2788 = vunpack.c.h.bf16 %v249
        %v2789 = vunpack.c.l.bf16 %v250
        %v2790 = vunpack.c.h.bf16 %v250
        %v2791 = vunpack.c.l.bf16 %v251
        %v2792 = vunpack.c.h.bf16 %v251
        %v2793 = vunpack.c.l.bf16 %v252
        %v2794 = vunpack.c.h.bf16 %v252
        %v2795 = vunpack.c.l.bf16 %v253
        %v2796 = vunpack.c.h.bf16 %v253
        %v2797 = vunpack.c.l.bf16 %v254
        %v2798 = vunpack.c.h.bf16 %v254
        %v2799 = vunpack.c.l.bf16 %v255
        %v2800 = vunpack.c.h.bf16 %v255
        %v2801 = vunpack.c.l.bf16 %v256
        %v2802 = vunpack.c.h.bf16 %v256
        %v2803 = vsub.f32 %v1266, %v2739
        %v2804 = vsub.f32 %v1444, %v2740
        %v2805 = vsub.f32 %v1268, %v2741
        %v2806 = vsub.f32 %v1446, %v2742
        %v2807 = vsub.f32 %v1271, %v2743
        %v2808 = vsub.f32 %v1449, %v2744
        %v2809 = vsub.f32 %v1273, %v2745
        %v2810 = vsub.f32 %v1451, %v2746
        %v2811 = vsub.f32 %v1276, %v2747
        %v2812 = vsub.f32 %v1454, %v2748
        %v2813 = vsub.f32 %v1278, %v2749
        %v2814 = vsub.f32 %v1456, %v2750
        %v2815 = vsub.f32 %v1281, %v2751
        %v2816 = vsub.f32 %v1459, %v2752
        %v2817 = vsub.f32 %v1283, %v2753
        %v2818 = vsub.f32 %v1461, %v2754
        %v2819 = vsub.f32 %v1286, %v2755
        %v2820 = vsub.f32 %v1464, %v2756
        %v2821 = vsub.f32 %v1288, %v2757
        %v2822 = vsub.f32 %v1466, %v2758
        %v2823 = vsub.f32 %v1291, %v2759
        %v2824 = vsub.f32 %v1469, %v2760
        %v2825 = vsub.f32 %v1293, %v2761
        %v2826 = vsub.f32 %v1471, %v2762
        %v2827 = vsub.f32 %v1296, %v2763
        %v2828 = vsub.f32 %v1474, %v2764
        %v2829 = vsub.f32 %v1298, %v2765
        %v2830 = vsub.f32 %v1476, %v2766
        %v2831 = vsub.f32 %v1301, %v2767
        %v2832 = vsub.f32 %v1479, %v2768
        %v2833 = vsub.f32 %v1303, %v2769
        %v2834 = vsub.f32 %v1481, %v2770
        %v2835 = vsub.f32 %v1306, %v2771
        %v2836 = vsub.f32 %v1484, %v2772
        %v2837 = vsub.f32 %v1308, %v2773
        %v2838 = vsub.f32 %v1486, %v2774
        %v2839 = vsub.f32 %v1311, %v2775
        %v2840 = vsub.f32 %v1489, %v2776
        %v2841 = vsub.f32 %v1313, %v2777
        %v2842 = vsub.f32 %v1491, %v2778
        %v2843 = vsub.f32 %v1316, %v2779
        %v2844 = vsub.f32 %v1494, %v2780
        %v2845 = vsub.f32 %v1318, %v2781
        %v2846 = vsub.f32 %v1496, %v2782
        %v2847 = vsub.f32 %v1321, %v2783
        %v2848 = vsub.f32 %v1499, %v2784
        %v2849 = vsub.f32 %v1323, %v2785
        %v2850 = vsub.f32 %v1501, %v2786
        %v2851 = vsub.f32 %v1326, %v2787
        %v2852 = vsub.f32 %v1504, %v2788
        %v2853 = vsub.f32 %v1328, %v2789
        %v2854 = vsub.f32 %v1506, %v2790
        %v2855 = vsub.f32 %v1331, %v2791
        %v2856 = vsub.f32 %v1509, %v2792
        %v2857 = vsub.f32 %v1333, %v2793
        %v2858 = vsub.f32 %v1511, %v2794
        %v2859 = vsub.f32 %v1336, %v2795
        %v2860 = vsub.f32 %v1514, %v2796
        %v2861 = vsub.f32 %v1338, %v2797
        %v2862 = vsub.f32 %v1516, %v2798
        %v2863 = vsub.f32 %v1341, %v2799
        %v2864 = vsub.f32 %v1519, %v2800
        %v2865 = vsub.f32 %v1343, %v2801
        %v2866 = vsub.f32 %v1521, %v2802
        %v2867 = vmul.f32 %v1793, %v2803
        %v2868 = vmul.f32 %v1808, %v2804
        %v2869 = vmul.f32 %v1823, %v2805
        %v2870 = vmul.f32 %v1838, %v2806
        %v2871 = vmul.f32 %v1853, %v2807
        %v2872 = vmul.f32 %v1868, %v2808
        %v2873 = vmul.f32 %v1883, %v2809
        %v2874 = vmul.f32 %v1898, %v2810
        %v2875 = vmul.f32 %v1913, %v2811
        %v2876 = vmul.f32 %v1928, %v2812
        %v2877 = vmul.f32 %v1943, %v2813
        %v2878 = vmul.f32 %v1958, %v2814
        %v2879 = vmul.f32 %v1973, %v2815
        %v2880 = vmul.f32 %v1988, %v2816
        %v2881 = vmul.f32 %v2003, %v2817
        %v2882 = vmul.f32 %v2018, %v2818
        %v2883 = vmul.f32 %v2033, %v2819
        %v2884 = vmul.f32 %v2048, %v2820
        %v2885 = vmul.f32 %v2063, %v2821
        %v2886 = vmul.f32 %v2078, %v2822
        %v2887 = vmul.f32 %v2093, %v2823
        %v2888 = vmul.f32 %v2108, %v2824
        %v2889 = vmul.f32 %v2123, %v2825
        %v2890 = vmul.f32 %v2138, %v2826
        %v2891 = vmul.f32 %v2153, %v2827
        %v2892 = vmul.f32 %v2168, %v2828
        %v2893 = vmul.f32 %v2183, %v2829
        %v2894 = vmul.f32 %v2198, %v2830
        %v2895 = vmul.f32 %v2213, %v2831
        %v2896 = vmul.f32 %v2228, %v2832
        %v2897 = vmul.f32 %v2243, %v2833
        %v2898 = vmul.f32 %v2258, %v2834
        %v2899 = vmul.f32 %v2273, %v2835
        %v2900 = vmul.f32 %v2288, %v2836
        %v2901 = vmul.f32 %v2303, %v2837
        %v2902 = vmul.f32 %v2318, %v2838
        %v2903 = vmul.f32 %v2333, %v2839
        %v2904 = vmul.f32 %v2348, %v2840
        %v2905 = vmul.f32 %v2363, %v2841
        %v2906 = vmul.f32 %v2378, %v2842
        %v2907 = vmul.f32 %v2393, %v2843
        %v2908 = vmul.f32 %v2408, %v2844
        %v2909 = vmul.f32 %v2423, %v2845
        %v2910 = vmul.f32 %v2438, %v2846
        %v2911 = vmul.f32 %v2453, %v2847
        %v2912 = vmul.f32 %v2468, %v2848
        %v2913 = vmul.f32 %v2483, %v2849
        %v2914 = vmul.f32 %v2498, %v2850
        %v2915 = vmul.f32 %v2513, %v2851
        %v2916 = vmul.f32 %v2528, %v2852
        %v2917 = vmul.f32 %v2543, %v2853
        %v2918 = vmul.f32 %v2558, %v2854
        %v2919 = vmul.f32 %v2573, %v2855
        %v2920 = vmul.f32 %v2588, %v2856
        %v2921 = vmul.f32 %v2603, %v2857
        %v2922 = vmul.f32 %v2618, %v2858
        %v2923 = vmul.f32 %v2633, %v2859
        %v2924 = vmul.f32 %v2648, %v2860
        %v2925 = vmul.f32 %v2663, %v2861
        %v2926 = vmul.f32 %v2678, %v2862
        %v2927 = vmul.f32 %v2693, %v2863
        %v2928 = vmul.f32 %v2708, %v2864
        %v2929 = vmul.f32 %v2723, %v2865
        %v2930 = vmul.f32 %v2738, %v2866
        %v2931 = vadd.f32 %v2739, %v2867
        %v2932 = vadd.f32 %v2740, %v2868
        %v2933 = vadd.f32 %v2741, %v2869
        %v2934 = vadd.f32 %v2742, %v2870
        %v2935 = vadd.f32 %v2743, %v2871
        %v2936 = vadd.f32 %v2744, %v2872
        %v2937 = vadd.f32 %v2745, %v2873
        %v2938 = vadd.f32 %v2746, %v2874
        %v2939 = vadd.f32 %v2747, %v2875
        %v2940 = vadd.f32 %v2748, %v2876
        %v2941 = vadd.f32 %v2749, %v2877
        %v2942 = vadd.f32 %v2750, %v2878
        %v2943 = vadd.f32 %v2751, %v2879
        %v2944 = vadd.f32 %v2752, %v2880
        %v2945 = vadd.f32 %v2753, %v2881
        %v2946 = vadd.f32 %v2754, %v2882
        %v2947 = vadd.f32 %v2755, %v2883
        %v2948 = vadd.f32 %v2756, %v2884
        %v2949 = vadd.f32 %v2757, %v2885
        %v2950 = vadd.f32 %v2758, %v2886
        %v2951 = vadd.f32 %v2759, %v2887
        %v2952 = vadd.f32 %v2760, %v2888
        %v2953 = vadd.f32 %v2761, %v2889
        %v2954 = vadd.f32 %v2762, %v2890
        %v2955 = vadd.f32 %v2763, %v2891
        %v2956 = vadd.f32 %v2764, %v2892
        %v2957 = vadd.f32 %v2765, %v2893
        %v2958 = vadd.f32 %v2766, %v2894
        %v2959 = vadd.f32 %v2767, %v2895
        %v2960 = vadd.f32 %v2768, %v2896
        %v2961 = vadd.f32 %v2769, %v2897
        %v2962 = vadd.f32 %v2770, %v2898
        %v2963 = vadd.f32 %v2771, %v2899
        %v2964 = vadd.f32 %v2772, %v2900
        %v2965 = vadd.f32 %v2773, %v2901
        %v2966 = vadd.f32 %v2774, %v2902
        %v2967 = vadd.f32 %v2775, %v2903
        %v2968 = vadd.f32 %v2776, %v2904
        %v2969 = vadd.f32 %v2777, %v2905
        %v2970 = vadd.f32 %v2778, %v2906
        %v2971 = vadd.f32 %v2779, %v2907
        %v2972 = vadd.f32 %v2780, %v2908
        %v2973 = vadd.f32 %v2781, %v2909
        %v2974 = vadd.f32 %v2782, %v2910
        %v2975 = vadd.f32 %v2783, %v2911
        %v2976 = vadd.f32 %v2784, %v2912
        %v2977 = vadd.f32 %v2785, %v2913
        %v2978 = vadd.f32 %v2786, %v2914
        %v2979 = vadd.f32 %v2787, %v2915
        %v2980 = vadd.f32 %v2788, %v2916
        %v2981 = vadd.f32 %v2789, %v2917
        %v2982 = vadd.f32 %v2790, %v2918
        %v2983 = vadd.f32 %v2791, %v2919
        %v2984 = vadd.f32 %v2792, %v2920
        %v2985 = vadd.f32 %v2793, %v2921
        %v2986 = vadd.f32 %v2794, %v2922
        %v2987 = vadd.f32 %v2795, %v2923
        %v2988 = vadd.f32 %v2796, %v2924
        %v2989 = vadd.f32 %v2797, %v2925
        %v2990 = vadd.f32 %v2798, %v2926
        %v2991 = vadd.f32 %v2799, %v2927
        %v2992 = vadd.f32 %v2800, %v2928
        %v2993 = vadd.f32 %v2801, %v2929
        %v2994 = vadd.f32 %v2802, %v2930
        %v2995 = vpack.c.bf16 %v2932, %v2931
        %v2996 = vpack.c.bf16 %v2934, %v2933
        %v2997 = vpack.c.bf16 %v2936, %v2935
        %v2998 = vpack.c.bf16 %v2938, %v2937
        %v2999 = vpack.c.bf16 %v2940, %v2939
        %v3000 = vpack.c.bf16 %v2942, %v2941
        %v3001 = vpack.c.bf16 %v2944, %v2943
        %v3002 = vpack.c.bf16 %v2946, %v2945
        %v3003 = vpack.c.bf16 %v2948, %v2947
        %v3004 = vpack.c.bf16 %v2950, %v2949
        %v3005 = vpack.c.bf16 %v2952, %v2951
        %v3006 = vpack.c.bf16 %v2954, %v2953
        %v3007 = vpack.c.bf16 %v2956, %v2955
        %v3008 = vpack.c.bf16 %v2958, %v2957
        %v3009 = vpack.c.bf16 %v2960, %v2959
        %v3010 = vpack.c.bf16 %v2962, %v2961
        %v3011 = vpack.c.bf16 %v2964, %v2963
        %v3012 = vpack.c.bf16 %v2966, %v2965
        %v3013 = vpack.c.bf16 %v2968, %v2967
        %v3014 = vpack.c.bf16 %v2970, %v2969
        %v3015 = vpack.c.bf16 %v2972, %v2971
        %v3016 = vpack.c.bf16 %v2974, %v2973
        %v3017 = vpack.c.bf16 %v2976, %v2975
        %v3018 = vpack.c.bf16 %v2978, %v2977
        %v3019 = vpack.c.bf16 %v2980, %v2979
        %v3020 = vpack.c.bf16 %v2982, %v2981
        %v3021 = vpack.c.bf16 %v2984, %v2983
        %v3022 = vpack.c.bf16 %v2986, %v2985
        %v3023 = vpack.c.bf16 %v2988, %v2987
        %v3024 = vpack.c.bf16 %v2990, %v2989
        %v3025 = vpack.c.bf16 %v2992, %v2991
        %v3026 = vpack.c.bf16 %v2994, %v2993
        %3027 = vst [vmem:[%s222] sm:$0xff] %v2995
        %3028 = vst [vmem:[%s222 + $0x8] sm:$0xff] %v2996
        %3029 = vst [vmem:[%s222 + $0x10] sm:$0xff] %v2997
        %3030 = vst [vmem:[%s222 + $0x18] sm:$0xff] %v2998
        %3031 = vst [vmem:[%s222 + $0x20] sm:$0xff] %v2999
        %3032 = vst [vmem:[%s222 + $0x28] sm:$0xff] %v3000
        %3033 = vst [vmem:[%s222 + $0x30] sm:$0xff] %v3001
        %3034 = vst [vmem:[%s222 + $0x38] sm:$0xff] %v3002
        %3035 = vst [vmem:[%s222 + $0x40] sm:$0xff] %v3003
        %3036 = vst [vmem:[%s222 + $0x48] sm:$0xff] %v3004
        %3037 = vst [vmem:[%s222 + $0x50] sm:$0xff] %v3005
        %3038 = vst [vmem:[%s222 + $0x58] sm:$0xff] %v3006
        %3039 = vst [vmem:[%s222 + $0x60] sm:$0xff] %v3007
        %3040 = vst [vmem:[%s222 + $0x68] sm:$0xff] %v3008
        %3041 = vst [vmem:[%s222 + $0x70] sm:$0xff] %v3009
        %3042 = vst [vmem:[%s222 + $0x78] sm:$0xff] %v3010
        %3043 = vst [vmem:[%s222 + $0x80] sm:$0xff] %v3011
        %3044 = vst [vmem:[%s222 + $0x88] sm:$0xff] %v3012
        %3045 = vst [vmem:[%s222 + $0x90] sm:$0xff] %v3013
        %3046 = vst [vmem:[%s222 + $0x98] sm:$0xff] %v3014
        %3047 = vst [vmem:[%s222 + $0xa0] sm:$0xff] %v3015
        %3048 = vst [vmem:[%s222 + $0xa8] sm:$0xff] %v3016
        %3049 = vst [vmem:[%s222 + $0xb0] sm:$0xff] %v3017
        %3050 = vst [vmem:[%s222 + $0xb8] sm:$0xff] %v3018
        %3051 = vst [vmem:[%s222 + $0xc0] sm:$0xff] %v3019
        %3052 = vst [vmem:[%s222 + $0xc8] sm:$0xff] %v3020
        %3053 = vst [vmem:[%s222 + $0xd0] sm:$0xff] %v3021
        %3054 = vst [vmem:[%s222 + $0xd8] sm:$0xff] %v3022
        %3055 = vst [vmem:[%s222 + $0xe0] sm:$0xff] %v3023
        %3056 = vst [vmem:[%s222 + $0xe8] sm:$0xff] %v3024
        %3057 = vst [vmem:[%s222 + $0xf0] sm:$0xff] %v3025
        %3058 = vst [vmem:[%s222 + $0xf8] sm:$0xff] %v3026
        %s3059 = sand.u32 %s97, 1
        %s3060 = scalar_lea.sflag [#allocation4], %s3059
        %s3061 = sand.u32 %s97, 1
        %s3062 = smul.addr %s3061, 256
        %s3063 = scalar_lea.vmem [#allocation8], %s3062
        // Predicated region
        $region45: #{tpu_custom_call.1} parent=31 // pred_check
          %p3064 = pneg %p107
        $region46: #{tpu_custom_call.1} parent=31 // pred_check_branch
          %3066 = sbr.rel (%p3064) target = $region48
        $region47: #{tpu_custom_call.1} parent=31 // pred_region
          %s3067 = smul.u32 32, %s21
          %3069 = vsyncadd %s3060, 0
          %s3070 = smul.addr %s3067, 2
          %s3071 = smul.addr %s3070, 4
          %s3072 = scalar_lea.hbm %s3, %s3071
          %s3073 = sshll.u32 %s3063, 4
          %s3074 = int_to_ptr.vmem [resolvable:$true] %s3073
          %s3075 = sshll.u32 %s3072, 4
          %s3076 = int_to_ptr.hbm [resolvable:$true] %s3075
          %3081 = dma.vmem_to_hbm [thread:$0]  %s3074, 4096, %s3076, %s3060, 128, 128, 8
        $region48: #{tpu_custom_call.1} parent=31 // pred_fallthru
          _
      $region32: #{tpu_custom_call.1} parent=5 // pred_fallthru
        _
      %p3082 = scmp.le.s32.totalorder 2, %s16
      // Predicated region
      $region49: #{tpu_custom_call.1} parent=5 // pred_check
        %p3083 = pneg %p3082
      $region50: #{tpu_custom_call.1} parent=5 // pred_check_branch
        %3085 = sbr.rel (%p3083) target = $region52
      $region51: #{tpu_custom_call.1} parent=5 // pred_region
        %s3086 = ssub.s32 %s16, 2
        // Predicated region
        $region53: #{tpu_custom_call.1} parent=51 // pred_check
          %p3087 = pneg %p113
        $region54: #{tpu_custom_call.1} parent=51 // pred_check_branch
          %3089 = sbr.rel (%p3087) target = $region56
        $region55: #{tpu_custom_call.1} parent=51 // pred_region
          %s3090 = sand.u32 %s98, 1
          %s3091 = scalar_lea.sflag [#allocation4], %s3090
          %s3092 = sand.u32 %s98, 1
          %s3093 = smul.addr %s3092, 256
          %s3094 = scalar_lea.vmem [#allocation8], %s3093
          %3096 = dma.done %s3091, 4096
        $region56: #{tpu_custom_call.1} parent=51 // pred_fallthru
          _
      $region52: #{tpu_custom_call.1} parent=5 // pred_fallthru
        _
    $region6: #{tpu_custom_call.1} parent=1 // loop_footer
      %s20 = sadd.s32 1, %s16
    $region7: #{tpu_custom_call.1} parent=1 // loop_footer_branch
      %15 = sbr.rel target = $region3
    $region8: #{tpu_custom_call.1} parent=1 // loop_exit
      _
    %3097 = vsyncpa [#allocation3], 1
    %s3098 = scalar_lea.sflag [#allocation3], 1
    %3099 = vsyncpa %s3098, 1
    %3100 = vsyncpa [#allocation6], 1
    %3101 = vsyncpa [#allocation4], 1
    %s3102 = scalar_lea.sflag [#allocation4], 1
    %3103 = vsyncpa %s3102, 1

</llo_original>
